<compile_context>
chip_gen: v7x
topology: tpu7x:2x2x1
jax: 0.10.0
libtpu: 0.0.40
codegen_flags: <defaults>
</compile_context>

<pallas_src>
import functools

import jax
import jax.numpy as jnp
from jax import lax
from jax.experimental import pallas as pl
from jax.experimental.pallas import tpu as pltpu


# dot_general dims for A[M, C] . B[N, C] -> [M, N]  (A @ B^T, no transpose op).
_DN_NT = (((1,), (1,)), ((), ()))


# ------------------------------ Fused kernel --------------------------------

def _mha_fused_kernel(q_ref, k_ref, v_ref,
                      wq_ref, wk_ref, wv_ref, wo_ref,
                      bq_ref, bk_ref, bv_ref, bo_ref,
                      *rest, num_heads, d_h, inv_scale, masked):
    """Entire MHA forward in one kernel: projections, attention, combine, W_o."""
    if masked:
        m_ref, o_ref, vh_ref, att_ref = rest
    else:
        o_ref, vh_ref, att_ref = rest
        m_ref = None

    S, D = q_ref.shape
    H = num_heads
    G = S // H          # rows of the [S, D] activation owned by each head chunk
    B = D // d_h        # lane blocks of width d_h per row (== H)

    # Projections.  Q/K are produced directly in the module's transposed [D, S]
    # layout (W . X^T), so the head split below is a plain row slice; weights stay
    # in nn.Linear [out, in] layout (no host or in-kernel transposes).
    # TODO(synk): at realistic d_model, cast MXU operands to bf16 (f32 accumulate),
    # tile with a proper (M, N, K) grid and set vmem_limit_bytes; at S=8, D=32 a
    # single full block is optimal.
    qt = lax.dot_general(wq_ref[...], q_ref[...], _DN_NT,
                         preferred_element_type=jnp.float32) + bq_ref[...]    # [D, S]
    qt = qt * inv_scale        # scale Q once (D*S muls) instead of every score tile
    kt = lax.dot_general(wk_ref[...], k_ref[...], _DN_NT,
                         preferred_element_type=jnp.float32) + bk_ref[...]    # [D, S]
    vp = lax.dot_general(v_ref[...], wv_ref[...], _DN_NT,
                         preferred_element_type=jnp.float32) + bv_ref[...]    # [S, D]

    # Static per-head unroll inside ONE kernel step (no per-head grid dispatch).
    # TODO(synk): at realistic sizes, grid over heads / query tiles marked
    # "parallel" (v7x has 2 TensorCores) with a flash-style online softmax.
    for h in range(H):
        q_h = qt[h * d_h:(h + 1) * d_h, :]   # [d_h, S] == module's Qh[h] (S == d_h)
        k_h = kt[h * d_h:(h + 1) * d_h, :]   # [d_h, S] == module's Kh[h] pre-2nd-transpose
        s = lax.dot_general(q_h, k_h, _DN_NT,
                            preferred_element_type=jnp.float32)               # [S, S]
        mx = jnp.max(s, axis=-1, keepdims=True)
        e = jnp.exp(s - mx)
        l = jnp.sum(e, axis=-1, keepdims=True)
        p = e * pl.reciprocal(l, approx=True)                                 # EUP divide
        if masked:
            # Bug-compatible with the module: masked_fill is applied AFTER softmax.
            p = jnp.where(m_ref[...] != 0, jnp.float32(-1e9), p)

        # Module's V head split: Vh[h][u*B + w, :] = Vp[h*G + u, w*d_h:(w+1)*d_h]
        # (row-major flat reshape), done as static lane-segment copies via scratch.
        for u in range(G):
            for w in range(B):
                vh_ref[u * B + w:u * B + w + 1, :] = \
                    vp[h * G + u:h * G + u + 1, w * d_h:(w + 1) * d_h]

        att_h = jnp.dot(p, vh_ref[...], preferred_element_type=jnp.float32)   # [S, d_h]

        # Module's head combine (att.reshape(-1, S, d_model)): output row h*G + r
        # is the lane-concatenation of rows r*B .. r*B+B-1 of att_h.
        for r in range(G):
            for b in range(B):
                att_ref[h * G + r:h * G + r + 1, b * d_h:(b + 1) * d_h] = \
                    att_h[r * B + b:r * B + b + 1, :]

    # Output projection, written as a single lane-dense [S, D] block.
    out = lax.dot_general(att_ref[...], wo_ref[...], _DN_NT,
                          preferred_element_type=jnp.float32) + bo_ref[...]
    # TODO(synk): nn.Dropout(0.1) is stochastic in training mode; identity in eval.
    o_ref[...] = out.astype(o_ref.dtype)


# ------------------------------ Forward pass ---------------------------------

def multi_head_attention(Q, K, V, params, num_heads, mask=None):
    S, d_model = Q.shape
    assert d_model % num_heads == 0
    d_h = d_model // num_heads
    # The in-kernel Q/K head split relies on these (true for the tested shapes).
    # TODO(synk): general S != d_h / S % num_heads != 0 would need the per-chunk
    # reshape handled with the same lane-segment-copy trick as the V split.
    assert d_h == S, (d_h, S)
    assert S % num_heads == 0

    inv_scale = 1.0 / (float(d_model) ** 0.5)  # module scales by sqrt(d_model), not sqrt(d_h)

    sd = pl.BlockSpec((S, d_model), lambda i: (0, 0))
    dd = pl.BlockSpec((d_model, d_model), lambda i: (0, 0))
    dcol = pl.BlockSpec((d_model, 1), lambda i: (0, 0))
    drow = pl.BlockSpec((1, d_model), lambda i: (0, 0))

    in_specs = [sd, sd, sd, dd, dd, dd, dd, dcol, dcol, drow, drow]
    args = [Q, K, V,
            params["wq"], params["wk"], params["wv"], params["wo"],
            params["bq"].reshape(d_model, 1), params["bk"].reshape(d_model, 1),
            params["bv"].reshape(1, d_model), params["bo"].reshape(1, d_model)]

    masked = mask is not None
    if masked:
        # Single [S, S] mask, broadcast over heads inside the kernel.
        # TODO(synk): per-head masks would require an [H, S, S] input instead.
        mask2d = jnp.broadcast_to(mask, (S, S)).astype(jnp.int32)
        in_specs.append(pl.BlockSpec((S, S), lambda i: (0, 0)))
        args.append(mask2d)

    kernel = functools.partial(_mha_fused_kernel, num_heads=num_heads, d_h=d_h,
                               inv_scale=inv_scale, masked=masked)
    return pl.pallas_call(
        kernel,
        out_shape=jax.ShapeDtypeStruct((S, d_model), jnp.float32),
        grid=(1,),
        in_specs=in_specs,
        out_specs=sd,
        scratch_shapes=[pltpu.VMEM((S, d_h), jnp.float32),        # per-head Vh
                        pltpu.VMEM((S, d_model), jnp.float32)],   # combined heads
        compiler_params=pltpu.CompilerParams(dimension_semantics=("arbitrary",)),
    )(*args)


# --------------------------- Pure-JAX reference ------------------------------

def reference(Q, K, V, params, num_heads, mask=None):
    d_model = Q.shape[-1]
    d_h = d_model // num_heads
    S = Q.shape[-2]
    lin = lambda x, w, b: x @ w.T + b
    Qp, Kp, Vp = (lin(Q, params["wq"], params["bq"]),
                  lin(K, params["wk"], params["bk"]),
                  lin(V, params["wv"], params["bv"]))
    Qh = jnp.swapaxes(Qp, -1, -2).reshape(-1, num_heads, S, d_h)
    Kh = jnp.swapaxes(jnp.swapaxes(Kp, -1, -2).reshape(-1, num_heads, S, d_h), -1, -2)
    Vh = Vp.reshape(-1, num_heads, S, d_h)
    score = jax.nn.softmax(jnp.matmul(Qh, Kh) / (float(d_model) ** 0.5), axis=-1)
    if mask is not None:
        score = jnp.where(mask, -1e9, score)
    att = jnp.matmul(score, Vh)
    att = att.reshape(-1, S, d_model)[0]
    return lin(att, params["wo"], params["bo"])


# ----------------------------------- Main ------------------------------------

if __name__ == "__main__":
    d_model, num_heads, seq = 32, 4, 8
    key = jax.random.PRNGKey(0)
    ks = jax.random.split(key, 12)

    Q = jax.random.normal(ks[0], (seq, d_model), jnp.float32)
    K = jax.random.normal(ks[1], (seq, d_model), jnp.float32)
    V = jax.random.normal(ks[2], (seq, d_model), jnp.float32)

    params = {
        "wq": 0.1 * jax.random.normal(ks[3], (d_model, d_model), jnp.float32),
        "bq": 0.1 * jax.random.normal(ks[4], (d_model,), jnp.float32),
        "wk": 0.1 * jax.random.normal(ks[5], (d_model, d_model), jnp.float32),
        "bk": 0.1 * jax.random.normal(ks[6], (d_model,), jnp.float32),
        "wv": 0.1 * jax.random.normal(ks[7], (d_model, d_model), jnp.float32),
        "bv": 0.1 * jax.random.normal(ks[8], (d_model,), jnp.float32),
        "wo": 0.1 * jax.random.normal(ks[9], (d_model, d_model), jnp.float32),
        "bo": 0.1 * jax.random.normal(ks[10], (d_model,), jnp.float32),
    }
    mask = jax.random.bernoulli(ks[11], 0.25, (seq, seq))

    fwd = jax.jit(functools.partial(multi_head_attention, num_heads=num_heads))

    def check(name, out, ref, tol=1e-2):
        # Normalized max error.  Tolerance covers the EUP approximate reciprocal and
        # MXU-vs-XLA matmul rounding (structural errors are orders of magnitude bigger);
        # the masked path produces ~1e9-magnitude bug-compatible outputs, hence the
        # scale-aware normalization.
        assert out.shape == ref.shape, (name, out.shape, ref.shape)
        err = float(jnp.max(jnp.abs(out - ref))) / (1.0 + float(jnp.max(jnp.abs(ref))))
        assert err < tol, (name, err)

    out = jax.block_until_ready(fwd(Q, K, V, params))
    check("no_mask", out, reference(Q, K, V, params, num_heads))

    out_m = jax.block_until_ready(fwd(Q, K, V, params, mask=mask))
    check("masked", out_m, reference(Q, K, V, params, num_heads, mask=mask))

    print("KERNEL_OK")
</pallas_src>

<mosaic_0001>
module attributes {stable_mosaic.version = 11 : i64} {
  func.func @_mha_fused_kernel(%arg0: i32, %arg1: memref<8x32xf32, #tpu.memory_space<vmem>>, %arg2: memref<8x32xf32, #tpu.memory_space<vmem>>, %arg3: memref<8x32xf32, #tpu.memory_space<vmem>>, %arg4: memref<32x32xf32, #tpu.memory_space<vmem>>, %arg5: memref<32x32xf32, #tpu.memory_space<vmem>>, %arg6: memref<32x32xf32, #tpu.memory_space<vmem>>, %arg7: memref<32x32xf32, #tpu.memory_space<vmem>>, %arg8: memref<32x1xf32, #tpu.memory_space<vmem>>, %arg9: memref<32x1xf32, #tpu.memory_space<vmem>>, %arg10: memref<1x32xf32, #tpu.memory_space<vmem>>, %arg11: memref<1x32xf32, #tpu.memory_space<vmem>>, %arg12: memref<8x32xf32, #tpu.memory_space<vmem>>, %arg13: memref<8x8xf32, #tpu.memory_space<vmem>>, %arg14: memref<8x32xf32, #tpu.memory_space<vmem>>) attributes {dimension_semantics = [#tpu.dimension_semantics<arbitrary>], iteration_bounds = array<i64: 1>, scalar_prefetch = 0 : i64, scratch_operands = 2 : i64, tpu.core_type = #tpu.core_type<tc>, window_params = [{pipeline_mode = #tpu.pipeline_mode<synchronous>, transform_indices = @transform_0, window_bounds = array<i64: 8, 32>}, {pipeline_mode = #tpu.pipeline_mode<synchronous>, transform_indices = @transform_1, window_bounds = array<i64: 8, 32>}, {pipeline_mode = #tpu.pipeline_mode<synchronous>, transform_indices = @transform_2, window_bounds = array<i64: 8, 32>}, {pipeline_mode = #tpu.pipeline_mode<synchronous>, transform_indices = @transform_3, window_bounds = array<i64: 32, 32>}, {pipeline_mode = #tpu.pipeline_mode<synchronous>, transform_indices = @transform_4, window_bounds = array<i64: 32, 32>}, {pipeline_mode = #tpu.pipeline_mode<synchronous>, transform_indices = @transform_5, window_bounds = array<i64: 32, 32>}, {pipeline_mode = #tpu.pipeline_mode<synchronous>, transform_indices = @transform_6, window_bounds = array<i64: 32, 32>}, {pipeline_mode = #tpu.pipeline_mode<synchronous>, transform_indices = @transform_7, window_bounds = array<i64: 32, 1>}, {pipeline_mode = #tpu.pipeline_mode<synchronous>, transform_indices = @transform_8, window_bounds = array<i64: 32, 1>}, {pipeline_mode = #tpu.pipeline_mode<synchronous>, transform_indices = @transform_9, window_bounds = array<i64: 1, 32>}, {pipeline_mode = #tpu.pipeline_mode<synchronous>, transform_indices = @transform_10, window_bounds = array<i64: 1, 32>}, {pipeline_mode = #tpu.pipeline_mode<synchronous>, transform_indices = @transform_11, window_bounds = array<i64: 8, 32>}]} {
    %c0 = arith.constant 0 : index
    %c0_0 = arith.constant 0 : index
    %0 = vector.load %arg4[%c0, %c0_0] : memref<32x32xf32, #tpu.memory_space<vmem>>, vector<32x32xf32>
    %c0_1 = arith.constant 0 : index
    %c0_2 = arith.constant 0 : index
    %1 = vector.load %arg1[%c0_1, %c0_2] : memref<8x32xf32, #tpu.memory_space<vmem>>, vector<8x32xf32>
    %cst = arith.constant dense<0.000000e+00> : vector<32x8xf32>
    %2 = tpu.matmul %0, %1, %cst {dimension_numbers = #tpu.dot_dimension_numbers<[1], [1], [0], [0], [0, 0, 1, 0], [], []>} : vector<32x32xf32>, vector<8x32xf32>, vector<32x8xf32> -> vector<32x8xf32>
    %c0_3 = arith.constant 0 : index
    %c0_4 = arith.constant 0 : index
    %3 = vector.load %arg8[%c0_3, %c0_4] : memref<32x1xf32, #tpu.memory_space<vmem>>, vector<32x1xf32>
    %4 = vector.broadcast %3 : vector<32x1xf32> to vector<32x8xf32>
    %5 = arith.addf %2, %4 : vector<32x8xf32>
    %cst_5 = arith.constant 0.176776692 : f32
    %6 = vector.broadcast %cst_5 : f32 to vector<32x8xf32>
    %7 = arith.mulf %5, %6 : vector<32x8xf32>
    %c0_6 = arith.constant 0 : index
    %c0_7 = arith.constant 0 : index
    %8 = vector.load %arg5[%c0_6, %c0_7] : memref<32x32xf32, #tpu.memory_space<vmem>>, vector<32x32xf32>
    %c0_8 = arith.constant 0 : index
    %c0_9 = arith.constant 0 : index
    %9 = vector.load %arg2[%c0_8, %c0_9] : memref<8x32xf32, #tpu.memory_space<vmem>>, vector<8x32xf32>
    %cst_10 = arith.constant dense<0.000000e+00> : vector<32x8xf32>
    %10 = tpu.matmul %8, %9, %cst_10 {dimension_numbers = #tpu.dot_dimension_numbers<[1], [1], [0], [0], [0, 0, 1, 0], [], []>} : vector<32x32xf32>, vector<8x32xf32>, vector<32x8xf32> -> vector<32x8xf32>
    %c0_11 = arith.constant 0 : index
    %c0_12 = arith.constant 0 : index
    %11 = vector.load %arg9[%c0_11, %c0_12] : memref<32x1xf32, #tpu.memory_space<vmem>>, vector<32x1xf32>
    %12 = vector.broadcast %11 : vector<32x1xf32> to vector<32x8xf32>
    %13 = arith.addf %10, %12 : vector<32x8xf32>
    %c0_13 = arith.constant 0 : index
    %c0_14 = arith.constant 0 : index
    %14 = vector.load %arg3[%c0_13, %c0_14] : memref<8x32xf32, #tpu.memory_space<vmem>>, vector<8x32xf32>
    %c0_15 = arith.constant 0 : index
    %c0_16 = arith.constant 0 : index
    %15 = vector.load %arg6[%c0_15, %c0_16] : memref<32x32xf32, #tpu.memory_space<vmem>>, vector<32x32xf32>
    %cst_17 = arith.constant dense<0.000000e+00> : vector<8x32xf32>
    %16 = tpu.matmul %14, %15, %cst_17 {dimension_numbers = #tpu.dot_dimension_numbers<[1], [1], [0], [0], [0, 0, 1, 0], [], []>} : vector<8x32xf32>, vector<32x32xf32>, vector<8x32xf32> -> vector<8x32xf32>
    %c0_18 = arith.constant 0 : index
    %c0_19 = arith.constant 0 : index
    %17 = vector.load %arg10[%c0_18, %c0_19] : memref<1x32xf32, #tpu.memory_space<vmem>>, vector<1x32xf32>
    %18 = vector.broadcast %17 : vector<1x32xf32> to vector<8x32xf32>
    %19 = arith.addf %16, %18 : vector<8x32xf32>
    %20 = vector.extract_strided_slice %7 {offsets = [0, 0], sizes = [8, 8], strides = [1, 1]} : vector<32x8xf32> to vector<8x8xf32>
    %21 = vector.extract_strided_slice %13 {offsets = [0, 0], sizes = [8, 8], strides = [1, 1]} : vector<32x8xf32> to vector<8x8xf32>
    %cst_20 = arith.constant dense<0.000000e+00> : vector<8x8xf32>
    %22 = tpu.matmul %20, %21, %cst_20 {dimension_numbers = #tpu.dot_dimension_numbers<[1], [1], [0], [0], [0, 0, 1, 0], [], []>} : vector<8x8xf32>, vector<8x8xf32>, vector<8x8xf32> -> vector<8x8xf32>
    %cst_21 = arith.constant dense<0xFF800000> : vector<8xf32>
    %23 = vector.multi_reduction <maximumf>, %22, %cst_21 [1] : vector<8x8xf32> to vector<8xf32>
    %24 = vector.shape_cast %23 : vector<8xf32> to vector<8x1xf32>
    %25 = vector.broadcast %24 : vector<8x1xf32> to vector<8x8xf32>
    %26 = arith.subf %22, %25 : vector<8x8xf32>
    %27 = math.exp %26 : vector<8x8xf32>
    %cst_22 = arith.constant dense<0.000000e+00> : vector<8xf32>
    %28 = vector.multi_reduction <add>, %27, %cst_22 [1] : vector<8x8xf32> to vector<8xf32>
    %29 = vector.shape_cast %28 : vector<8xf32> to vector<8x1xf32>
    %30 = tpu.reciprocal %29 {approx = true} : vector<8x1xf32> -> vector<8x1xf32>
    %31 = vector.broadcast %30 : vector<8x1xf32> to vector<8x8xf32>
    %32 = arith.mulf %27, %31 : vector<8x8xf32>
    %33 = vector.extract_strided_slice %19 {offsets = [0, 0], sizes = [1, 8], strides = [1, 1]} : vector<8x32xf32> to vector<1x8xf32>
    %c0_23 = arith.constant 0 : index
    %c0_24 = arith.constant 0 : index
    %34 = vector.load %arg13[%c0_23, %c0_24] : memref<8x8xf32, #tpu.memory_space<vmem>>, vector<1x8xf32>
    tpu.vector_store %arg13[%c0_23, %c0_24], %33 {strides = array<i32>} : memref<8x8xf32, #tpu.memory_space<vmem>>, vector<1x8xf32>,
    %35 = vector.extract_strided_slice %19 {offsets = [0, 8], sizes = [1, 8], strides = [1, 1]} : vector<8x32xf32> to vector<1x8xf32>
    %c1 = arith.constant 1 : index
    %c0_25 = arith.constant 0 : index
    %36 = vector.load %arg13[%c1, %c0_25] : memref<8x8xf32, #tpu.memory_space<vmem>>, vector<1x8xf32>
    tpu.vector_store %arg13[%c1, %c0_25], %35 {strides = array<i32>} : memref<8x8xf32, #tpu.memory_space<vmem>>, vector<1x8xf32>,
    %37 = vector.extract_strided_slice %19 {offsets = [0, 16], sizes = [1, 8], strides = [1, 1]} : vector<8x32xf32> to vector<1x8xf32>
    %c2 = arith.constant 2 : index
    %c0_26 = arith.constant 0 : index
    %38 = vector.load %arg13[%c2, %c0_26] : memref<8x8xf32, #tpu.memory_space<vmem>>, vector<1x8xf32>
    tpu.vector_store %arg13[%c2, %c0_26], %37 {strides = array<i32>} : memref<8x8xf32, #tpu.memory_space<vmem>>, vector<1x8xf32>,
    %39 = vector.extract_strided_slice %19 {offsets = [0, 24], sizes = [1, 8], strides = [1, 1]} : vector<8x32xf32> to vector<1x8xf32>
    %c3 = arith.constant 3 : index
    %c0_27 = arith.constant 0 : index
    %40 = vector.load %arg13[%c3, %c0_27] : memref<8x8xf32, #tpu.memory_space<vmem>>, vector<1x8xf32>
    tpu.vector_store %arg13[%c3, %c0_27], %39 {strides = array<i32>} : memref<8x8xf32, #tpu.memory_space<vmem>>, vector<1x8xf32>,
    %41 = vector.extract_strided_slice %19 {offsets = [1, 0], sizes = [1, 8], strides = [1, 1]} : vector<8x32xf32> to vector<1x8xf32>
    %c4 = arith.constant 4 : index
    %c0_28 = arith.constant 0 : index
    %42 = vector.load %arg13[%c4, %c0_28] : memref<8x8xf32, #tpu.memory_space<vmem>>, vector<1x8xf32>
    tpu.vector_store %arg13[%c4, %c0_28], %41 {strides = array<i32>} : memref<8x8xf32, #tpu.memory_space<vmem>>, vector<1x8xf32>,
    %43 = vector.extract_strided_slice %19 {offsets = [1, 8], sizes = [1, 8], strides = [1, 1]} : vector<8x32xf32> to vector<1x8xf32>
    %c5 = arith.constant 5 : index
    %c0_29 = arith.constant 0 : index
    %44 = vector.load %arg13[%c5, %c0_29] : memref<8x8xf32, #tpu.memory_space<vmem>>, vector<1x8xf32>
    tpu.vector_store %arg13[%c5, %c0_29], %43 {strides = array<i32>} : memref<8x8xf32, #tpu.memory_space<vmem>>, vector<1x8xf32>,
    %45 = vector.extract_strided_slice %19 {offsets = [1, 16], sizes = [1, 8], strides = [1, 1]} : vector<8x32xf32> to vector<1x8xf32>
    %c6 = arith.constant 6 : index
    %c0_30 = arith.constant 0 : index
    %46 = vector.load %arg13[%c6, %c0_30] : memref<8x8xf32, #tpu.memory_space<vmem>>, vector<1x8xf32>
    tpu.vector_store %arg13[%c6, %c0_30], %45 {strides = array<i32>} : memref<8x8xf32, #tpu.memory_space<vmem>>, vector<1x8xf32>,
    %47 = vector.extract_strided_slice %19 {offsets = [1, 24], sizes = [1, 8], strides = [1, 1]} : vector<8x32xf32> to vector<1x8xf32>
    %c7 = arith.constant 7 : index
    %c0_31 = arith.constant 0 : index
    %48 = vector.load %arg13[%c7, %c0_31] : memref<8x8xf32, #tpu.memory_space<vmem>>, vector<1x8xf32>
    tpu.vector_store %arg13[%c7, %c0_31], %47 {strides = array<i32>} : memref<8x8xf32, #tpu.memory_space<vmem>>, vector<1x8xf32>,
    %c0_32 = arith.constant 0 : index
    %c0_33 = arith.constant 0 : index
    %49 = vector.load %arg13[%c0_32, %c0_33] : memref<8x8xf32, #tpu.memory_space<vmem>>, vector<8x8xf32>
    %cst_34 = arith.constant dense<0.000000e+00> : vector<8x8xf32>
    %50 = tpu.matmul %32, %49, %cst_34 {dimension_numbers = #tpu.dot_dimension_numbers<[1], [0], [0], [1], [0, 0, 1, 1], [], []>} : vector<8x8xf32>, vector<8x8xf32>, vector<8x8xf32> -> vector<8x8xf32>
    %51 = vector.extract_strided_slice %50 {offsets = [0, 0], sizes = [1, 8], strides = [1, 1]} : vector<8x8xf32> to vector<1x8xf32>
    %c0_35 = arith.constant 0 : index
    %c0_36 = arith.constant 0 : index
    %52 = vector.load %arg14[%c0_35, %c0_36] : memref<8x32xf32, #tpu.memory_space<vmem>>, vector<1x8xf32>
    tpu.vector_store %arg14[%c0_35, %c0_36], %51 {strides = array<i32>} : memref<8x32xf32, #tpu.memory_space<vmem>>, vector<1x8xf32>,
    %53 = vector.extract_strided_slice %50 {offsets = [1, 0], sizes = [1, 8], strides = [1, 1]} : vector<8x8xf32> to vector<1x8xf32>
    %c0_37 = arith.constant 0 : index
    %c8 = arith.constant 8 : index
    %54 = vector.load %arg14[%c0_37, %c8] : memref<8x32xf32, #tpu.memory_space<vmem>>, vector<1x8xf32>
    tpu.vector_store %arg14[%c0_37, %c8], %53 {strides = array<i32>} : memref<8x32xf32, #tpu.memory_space<vmem>>, vector<1x8xf32>,
    %55 = vector.extract_strided_slice %50 {offsets = [2, 0], sizes = [1, 8], strides = [1, 1]} : vector<8x8xf32> to vector<1x8xf32>
    %c0_38 = arith.constant 0 : index
    %c16 = arith.constant 16 : index
    %56 = vector.load %arg14[%c0_38, %c16] : memref<8x32xf32, #tpu.memory_space<vmem>>, vector<1x8xf32>
    tpu.vector_store %arg14[%c0_38, %c16], %55 {strides = array<i32>} : memref<8x32xf32, #tpu.memory_space<vmem>>, vector<1x8xf32>,
    %57 = vector.extract_strided_slice %50 {offsets = [3, 0], sizes = [1, 8], strides = [1, 1]} : vector<8x8xf32> to vector<1x8xf32>
    %c0_39 = arith.constant 0 : index
    %c24 = arith.constant 24 : index
    %58 = vector.load %arg14[%c0_39, %c24] : memref<8x32xf32, #tpu.memory_space<vmem>>, vector<1x8xf32>
    tpu.vector_store %arg14[%c0_39, %c24], %57 {strides = array<i32>} : memref<8x32xf32, #tpu.memory_space<vmem>>, vector<1x8xf32>,
    %59 = vector.extract_strided_slice %50 {offsets = [4, 0], sizes = [1, 8], strides = [1, 1]} : vector<8x8xf32> to vector<1x8xf32>
    %c1_40 = arith.constant 1 : index
    %c0_41 = arith.constant 0 : index
    %60 = vector.load %arg14[%c1_40, %c0_41] : memref<8x32xf32, #tpu.memory_space<vmem>>, vector<1x8xf32>
    tpu.vector_store %arg14[%c1_40, %c0_41], %59 {strides = array<i32>} : memref<8x32xf32, #tpu.memory_space<vmem>>, vector<1x8xf32>,
    %61 = vector.extract_strided_slice %50 {offsets = [5, 0], sizes = [1, 8], strides = [1, 1]} : vector<8x8xf32> to vector<1x8xf32>
    %c1_42 = arith.constant 1 : index
    %c8_43 = arith.constant 8 : index
    %62 = vector.load %arg14[%c1_42, %c8_43] : memref<8x32xf32, #tpu.memory_space<vmem>>, vector<1x8xf32>
    tpu.vector_store %arg14[%c1_42, %c8_43], %61 {strides = array<i32>} : memref<8x32xf32, #tpu.memory_space<vmem>>, vector<1x8xf32>,
    %63 = vector.extract_strided_slice %50 {offsets = [6, 0], sizes = [1, 8], strides = [1, 1]} : vector<8x8xf32> to vector<1x8xf32>
    %c1_44 = arith.constant 1 : index
    %c16_45 = arith.constant 16 : index
    %64 = vector.load %arg14[%c1_44, %c16_45] : memref<8x32xf32, #tpu.memory_space<vmem>>, vector<1x8xf32>
    tpu.vector_store %arg14[%c1_44, %c16_45], %63 {strides = array<i32>} : memref<8x32xf32, #tpu.memory_space<vmem>>, vector<1x8xf32>,
    %65 = vector.extract_strided_slice %50 {offsets = [7, 0], sizes = [1, 8], strides = [1, 1]} : vector<8x8xf32> to vector<1x8xf32>
    %c1_46 = arith.constant 1 : index
    %c24_47 = arith.constant 24 : index
    %66 = vector.load %arg14[%c1_46, %c24_47] : memref<8x32xf32, #tpu.memory_space<vmem>>, vector<1x8xf32>
    tpu.vector_store %arg14[%c1_46, %c24_47], %65 {strides = array<i32>} : memref<8x32xf32, #tpu.memory_space<vmem>>, vector<1x8xf32>,
    %67 = vector.extract_strided_slice %7 {offsets = [8, 0], sizes = [8, 8], strides = [1, 1]} : vector<32x8xf32> to vector<8x8xf32>
    %68 = vector.extract_strided_slice %13 {offsets = [8, 0], sizes = [8, 8], strides = [1, 1]} : vector<32x8xf32> to vector<8x8xf32>
    %cst_48 = arith.constant dense<0.000000e+00> : vector<8x8xf32>
    %69 = tpu.matmul %67, %68, %cst_48 {dimension_numbers = #tpu.dot_dimension_numbers<[1], [1], [0], [0], [0, 0, 1, 0], [], []>} : vector<8x8xf32>, vector<8x8xf32>, vector<8x8xf32> -> vector<8x8xf32>
    %cst_49 = arith.constant dense<0xFF800000> : vector<8xf32>
    %70 = vector.multi_reduction <maximumf>, %69, %cst_49 [1] : vector<8x8xf32> to vector<8xf32>
    %71 = vector.shape_cast %70 : vector<8xf32> to vector<8x1xf32>
    %72 = vector.broadcast %71 : vector<8x1xf32> to vector<8x8xf32>
    %73 = arith.subf %69, %72 : vector<8x8xf32>
    %74 = math.exp %73 : vector<8x8xf32>
    %cst_50 = arith.constant dense<0.000000e+00> : vector<8xf32>
    %75 = vector.multi_reduction <add>, %74, %cst_50 [1] : vector<8x8xf32> to vector<8xf32>
    %76 = vector.shape_cast %75 : vector<8xf32> to vector<8x1xf32>
    %77 = tpu.reciprocal %76 {approx = true} : vector<8x1xf32> -> vector<8x1xf32>
    %78 = vector.broadcast %77 : vector<8x1xf32> to vector<8x8xf32>
    %79 = arith.mulf %74, %78 : vector<8x8xf32>
    %80 = vector.extract_strided_slice %19 {offsets = [2, 0], sizes = [1, 8], strides = [1, 1]} : vector<8x32xf32> to vector<1x8xf32>
    %c0_51 = arith.constant 0 : index
    %c0_52 = arith.constant 0 : index
    %81 = vector.load %arg13[%c0_51, %c0_52] : memref<8x8xf32, #tpu.memory_space<vmem>>, vector<1x8xf32>
    tpu.vector_store %arg13[%c0_51, %c0_52], %80 {strides = array<i32>} : memref<8x8xf32, #tpu.memory_space<vmem>>, vector<1x8xf32>,
    %82 = vector.extract_strided_slice %19 {offsets = [2, 8], sizes = [1, 8], strides = [1, 1]} : vector<8x32xf32> to vector<1x8xf32>
    %c1_53 = arith.constant 1 : index
    %c0_54 = arith.constant 0 : index
    %83 = vector.load %arg13[%c1_53, %c0_54] : memref<8x8xf32, #tpu.memory_space<vmem>>, vector<1x8xf32>
    tpu.vector_store %arg13[%c1_53, %c0_54], %82 {strides = array<i32>} : memref<8x8xf32, #tpu.memory_space<vmem>>, vector<1x8xf32>,
    %84 = vector.extract_strided_slice %19 {offsets = [2, 16], sizes = [1, 8], strides = [1, 1]} : vector<8x32xf32> to vector<1x8xf32>
    %c2_55 = arith.constant 2 : index
    %c0_56 = arith.constant 0 : index
    %85 = vector.load %arg13[%c2_55, %c0_56] : memref<8x8xf32, #tpu.memory_space<vmem>>, vector<1x8xf32>
    tpu.vector_store %arg13[%c2_55, %c0_56], %84 {strides = array<i32>} : memref<8x8xf32, #tpu.memory_space<vmem>>, vector<1x8xf32>,
    %86 = vector.extract_strided_slice %19 {offsets = [2, 24], sizes = [1, 8], strides = [1, 1]} : vector<8x32xf32> to vector<1x8xf32>
    %c3_57 = arith.constant 3 : index
    %c0_58 = arith.constant 0 : index
    %87 = vector.load %arg13[%c3_57, %c0_58] : memref<8x8xf32, #tpu.memory_space<vmem>>, vector<1x8xf32>
    tpu.vector_store %arg13[%c3_57, %c0_58], %86 {strides = array<i32>} : memref<8x8xf32, #tpu.memory_space<vmem>>, vector<1x8xf32>,
    %88 = vector.extract_strided_slice %19 {offsets = [3, 0], sizes = [1, 8], strides = [1, 1]} : vector<8x32xf32> to vector<1x8xf32>
    %c4_59 = arith.constant 4 : index
    %c0_60 = arith.constant 0 : index
    %89 = vector.load %arg13[%c4_59, %c0_60] : memref<8x8xf32, #tpu.memory_space<vmem>>, vector<1x8xf32>
    tpu.vector_store %arg13[%c4_59, %c0_60], %88 {strides = array<i32>} : memref<8x8xf32, #tpu.memory_space<vmem>>, vector<1x8xf32>,
    %90 = vector.extract_strided_slice %19 {offsets = [3, 8], sizes = [1, 8], strides = [1, 1]} : vector<8x32xf32> to vector<1x8xf32>
    %c5_61 = arith.constant 5 : index
    %c0_62 = arith.constant 0 : index
    %91 = vector.load %arg13[%c5_61, %c0_62] : memref<8x8xf32, #tpu.memory_space<vmem>>, vector<1x8xf32>
    tpu.vector_store %arg13[%c5_61, %c0_62], %90 {strides = array<i32>} : memref<8x8xf32, #tpu.memory_space<vmem>>, vector<1x8xf32>,
    %92 = vector.extract_strided_slice %19 {offsets = [3, 16], sizes = [1, 8], strides = [1, 1]} : vector<8x32xf32> to vector<1x8xf32>
    %c6_63 = arith.constant 6 : index
    %c0_64 = arith.constant 0 : index
    %93 = vector.load %arg13[%c6_63, %c0_64] : memref<8x8xf32, #tpu.memory_space<vmem>>, vector<1x8xf32>
    tpu.vector_store %arg13[%c6_63, %c0_64], %92 {strides = array<i32>} : memref<8x8xf32, #tpu.memory_space<vmem>>, vector<1x8xf32>,
    %94 = vector.extract_strided_slice %19 {offsets = [3, 24], sizes = [1, 8], strides = [1, 1]} : vector<8x32xf32> to vector<1x8xf32>
    %c7_65 = arith.constant 7 : index
    %c0_66 = arith.constant 0 : index
    %95 = vector.load %arg13[%c7_65, %c0_66] : memref<8x8xf32, #tpu.memory_space<vmem>>, vector<1x8xf32>
    tpu.vector_store %arg13[%c7_65, %c0_66], %94 {strides = array<i32>} : memref<8x8xf32, #tpu.memory_space<vmem>>, vector<1x8xf32>,
    %c0_67 = arith.constant 0 : index
    %c0_68 = arith.constant 0 : index
    %96 = vector.load %arg13[%c0_67, %c0_68] : memref<8x8xf32, #tpu.memory_space<vmem>>, vector<8x8xf32>
    %cst_69 = arith.constant dense<0.000000e+00> : vector<8x8xf32>
    %97 = tpu.matmul %79, %96, %cst_69 {dimension_numbers = #tpu.dot_dimension_numbers<[1], [0], [0], [1], [0, 0, 1, 1], [], []>} : vector<8x8xf32>, vector<8x8xf32>, vector<8x8xf32> -> vector<8x8xf32>
    %98 = vector.extract_strided_slice %97 {offsets = [0, 0], sizes = [1, 8], strides = [1, 1]} : vector<8x8xf32> to vector<1x8xf32>
    %c2_70 = arith.constant 2 : index
    %c0_71 = arith.constant 0 : index
    %99 = vector.load %arg14[%c2_70, %c0_71] : memref<8x32xf32, #tpu.memory_space<vmem>>, vector<1x8xf32>
    tpu.vector_store %arg14[%c2_70, %c0_71], %98 {strides = array<i32>} : memref<8x32xf32, #tpu.memory_space<vmem>>, vector<1x8xf32>,
    %100 = vector.extract_strided_slice %97 {offsets = [1, 0], sizes = [1, 8], strides = [1, 1]} : vector<8x8xf32> to vector<1x8xf32>
    %c2_72 = arith.constant 2 : index
    %c8_73 = arith.constant 8 : index
    %101 = vector.load %arg14[%c2_72, %c8_73] : memref<8x32xf32, #tpu.memory_space<vmem>>, vector<1x8xf32>
    tpu.vector_store %arg14[%c2_72, %c8_73], %100 {strides = array<i32>} : memref<8x32xf32, #tpu.memory_space<vmem>>, vector<1x8xf32>,
    %102 = vector.extract_strided_slice %97 {offsets = [2, 0], sizes = [1, 8], strides = [1, 1]} : vector<8x8xf32> to vector<1x8xf32>
    %c2_74 = arith.constant 2 : index
    %c16_75 = arith.constant 16 : index
    %103 = vector.load %arg14[%c2_74, %c16_75] : memref<8x32xf32, #tpu.memory_space<vmem>>, vector<1x8xf32>
    tpu.vector_store %arg14[%c2_74, %c16_75], %102 {strides = array<i32>} : memref<8x32xf32, #tpu.memory_space<vmem>>, vector<1x8xf32>,
    %104 = vector.extract_strided_slice %97 {offsets = [3, 0], sizes = [1, 8], strides = [1, 1]} : vector<8x8xf32> to vector<1x8xf32>
    %c2_76 = arith.constant 2 : index
    %c24_77 = arith.constant 24 : index
    %105 = vector.load %arg14[%c2_76, %c24_77] : memref<8x32xf32, #tpu.memory_space<vmem>>, vector<1x8xf32>
    tpu.vector_store %arg14[%c2_76, %c24_77], %104 {strides = array<i32>} : memref<8x32xf32, #tpu.memory_space<vmem>>, vector<1x8xf32>,
    %106 = vector.extract_strided_slice %97 {offsets = [4, 0], sizes = [1, 8], strides = [1, 1]} : vector<8x8xf32> to vector<1x8xf32>
    %c3_78 = arith.constant 3 : index
    %c0_79 = arith.constant 0 : index
    %107 = vector.load %arg14[%c3_78, %c0_79] : memref<8x32xf32, #tpu.memory_space<vmem>>, vector<1x8xf32>
    tpu.vector_store %arg14[%c3_78, %c0_79], %106 {strides = array<i32>} : memref<8x32xf32, #tpu.memory_space<vmem>>, vector<1x8xf32>,
    %108 = vector.extract_strided_slice %97 {offsets = [5, 0], sizes = [1, 8], strides = [1, 1]} : vector<8x8xf32> to vector<1x8xf32>
    %c3_80 = arith.constant 3 : index
    %c8_81 = arith.constant 8 : index
    %109 = vector.load %arg14[%c3_80, %c8_81] : memref<8x32xf32, #tpu.memory_space<vmem>>, vector<1x8xf32>
    tpu.vector_store %arg14[%c3_80, %c8_81], %108 {strides = array<i32>} : memref<8x32xf32, #tpu.memory_space<vmem>>, vector<1x8xf32>,
    %110 = vector.extract_strided_slice %97 {offsets = [6, 0], sizes = [1, 8], strides = [1, 1]} : vector<8x8xf32> to vector<1x8xf32>
    %c3_82 = arith.constant 3 : index
    %c16_83 = arith.constant 16 : index
    %111 = vector.load %arg14[%c3_82, %c16_83] : memref<8x32xf32, #tpu.memory_space<vmem>>, vector<1x8xf32>
    tpu.vector_store %arg14[%c3_82, %c16_83], %110 {strides = array<i32>} : memref<8x32xf32, #tpu.memory_space<vmem>>, vector<1x8xf32>,
    %112 = vector.extract_strided_slice %97 {offsets = [7, 0], sizes = [1, 8], strides = [1, 1]} : vector<8x8xf32> to vector<1x8xf32>
    %c3_84 = arith.constant 3 : index
    %c24_85 = arith.constant 24 : index
    %113 = vector.load %arg14[%c3_84, %c24_85] : memref<8x32xf32, #tpu.memory_space<vmem>>, vector<1x8xf32>
    tpu.vector_store %arg14[%c3_84, %c24_85], %112 {strides = array<i32>} : memref<8x32xf32, #tpu.memory_space<vmem>>, vector<1x8xf32>,
    %114 = vector.extract_strided_slice %7 {offsets = [16, 0], sizes = [8, 8], strides = [1, 1]} : vector<32x8xf32> to vector<8x8xf32>
    %115 = vector.extract_strided_slice %13 {offsets = [16, 0], sizes = [8, 8], strides = [1, 1]} : vector<32x8xf32> to vector<8x8xf32>
    %cst_86 = arith.constant dense<0.000000e+00> : vector<8x8xf32>
    %116 = tpu.matmul %114, %115, %cst_86 {dimension_numbers = #tpu.dot_dimension_numbers<[1], [1], [0], [0], [0, 0, 1, 0], [], []>} : vector<8x8xf32>, vector<8x8xf32>, vector<8x8xf32> -> vector<8x8xf32>
    %cst_87 = arith.constant dense<0xFF800000> : vector<8xf32>
    %117 = vector.multi_reduction <maximumf>, %116, %cst_87 [1] : vector<8x8xf32> to vector<8xf32>
    %118 = vector.shape_cast %117 : vector<8xf32> to vector<8x1xf32>
    %119 = vector.broadcast %118 : vector<8x1xf32> to vector<8x8xf32>
    %120 = arith.subf %116, %119 : vector<8x8xf32>
    %121 = math.exp %120 : vector<8x8xf32>
    %cst_88 = arith.constant dense<0.000000e+00> : vector<8xf32>
    %122 = vector.multi_reduction <add>, %121, %cst_88 [1] : vector<8x8xf32> to vector<8xf32>
    %123 = vector.shape_cast %122 : vector<8xf32> to vector<8x1xf32>
    %124 = tpu.reciprocal %123 {approx = true} : vector<8x1xf32> -> vector<8x1xf32>
    %125 = vector.broadcast %124 : vector<8x1xf32> to vector<8x8xf32>
    %126 = arith.mulf %121, %125 : vector<8x8xf32>
    %127 = vector.extract_strided_slice %19 {offsets = [4, 0], sizes = [1, 8], strides = [1, 1]} : vector<8x32xf32> to vector<1x8xf32>
    %c0_89 = arith.constant 0 : index
    %c0_90 = arith.constant 0 : index
    %128 = vector.load %arg13[%c0_89, %c0_90] : memref<8x8xf32, #tpu.memory_space<vmem>>, vector<1x8xf32>
    tpu.vector_store %arg13[%c0_89, %c0_90], %127 {strides = array<i32>} : memref<8x8xf32, #tpu.memory_space<vmem>>, vector<1x8xf32>,
    %129 = vector.extract_strided_slice %19 {offsets = [4, 8], sizes = [1, 8], strides = [1, 1]} : vector<8x32xf32> to vector<1x8xf32>
    %c1_91 = arith.constant 1 : index
    %c0_92 = arith.constant 0 : index
    %130 = vector.load %arg13[%c1_91, %c0_92] : memref<8x8xf32, #tpu.memory_space<vmem>>, vector<1x8xf32>
    tpu.vector_store %arg13[%c1_91, %c0_92], %129 {strides = array<i32>} : memref<8x8xf32, #tpu.memory_space<vmem>>, vector<1x8xf32>,
    %131 = vector.extract_strided_slice %19 {offsets = [4, 16], sizes = [1, 8], strides = [1, 1]} : vector<8x32xf32> to vector<1x8xf32>
    %c2_93 = arith.constant 2 : index
    %c0_94 = arith.constant 0 : index
    %132 = vector.load %arg13[%c2_93, %c0_94] : memref<8x8xf32, #tpu.memory_space<vmem>>, vector<1x8xf32>
    tpu.vector_store %arg13[%c2_93, %c0_94], %131 {strides = array<i32>} : memref<8x8xf32, #tpu.memory_space<vmem>>, vector<1x8xf32>,
    %133 = vector.extract_strided_slice %19 {offsets = [4, 24], sizes = [1, 8], strides = [1, 1]} : vector<8x32xf32> to vector<1x8xf32>
    %c3_95 = arith.constant 3 : index
    %c0_96 = arith.constant 0 : index
    %134 = vector.load %arg13[%c3_95, %c0_96] : memref<8x8xf32, #tpu.memory_space<vmem>>, vector<1x8xf32>
    tpu.vector_store %arg13[%c3_95, %c0_96], %133 {strides = array<i32>} : memref<8x8xf32, #tpu.memory_space<vmem>>, vector<1x8xf32>,
    %135 = vector.extract_strided_slice %19 {offsets = [5, 0], sizes = [1, 8], strides = [1, 1]} : vector<8x32xf32> to vector<1x8xf32>
    %c4_97 = arith.constant 4 : index
    %c0_98 = arith.constant 0 : index
    %136 = vector.load %arg13[%c4_97, %c0_98] : memref<8x8xf32, #tpu.memory_space<vmem>>, vector<1x8xf32>
    tpu.vector_store %arg13[%c4_97, %c0_98], %135 {strides = array<i32>} : memref<8x8xf32, #tpu.memory_space<vmem>>, vector<1x8xf32>,
    %137 = vector.extract_strided_slice %19 {offsets = [5, 8], sizes = [1, 8], strides = [1, 1]} : vector<8x32xf32> to vector<1x8xf32>
    %c5_99 = arith.constant 5 : index
    %c0_100 = arith.constant 0 : index
    %138 = vector.load %arg13[%c5_99, %c0_100] : memref<8x8xf32, #tpu.memory_space<vmem>>, vector<1x8xf32>
    tpu.vector_store %arg13[%c5_99, %c0_100], %137 {strides = array<i32>} : memref<8x8xf32, #tpu.memory_space<vmem>>, vector<1x8xf32>,
    %139 = vector.extract_strided_slice %19 {offsets = [5, 16], sizes = [1, 8], strides = [1, 1]} : vector<8x32xf32> to vector<1x8xf32>
    %c6_101 = arith.constant 6 : index
    %c0_102 = arith.constant 0 : index
    %140 = vector.load %arg13[%c6_101, %c0_102] : memref<8x8xf32, #tpu.memory_space<vmem>>, vector<1x8xf32>
    tpu.vector_store %arg13[%c6_101, %c0_102], %139 {strides = array<i32>} : memref<8x8xf32, #tpu.memory_space<vmem>>, vector<1x8xf32>,
    %141 = vector.extract_strided_slice %19 {offsets = [5, 24], sizes = [1, 8], strides = [1, 1]} : vector<8x32xf32> to vector<1x8xf32>
    %c7_103 = arith.constant 7 : index
    %c0_104 = arith.constant 0 : index
    %142 = vector.load %arg13[%c7_103, %c0_104] : memref<8x8xf32, #tpu.memory_space<vmem>>, vector<1x8xf32>
    tpu.vector_store %arg13[%c7_103, %c0_104], %141 {strides = array<i32>} : memref<8x8xf32, #tpu.memory_space<vmem>>, vector<1x8xf32>,
    %c0_105 = arith.constant 0 : index
    %c0_106 = arith.constant 0 : index
    %143 = vector.load %arg13[%c0_105, %c0_106] : memref<8x8xf32, #tpu.memory_space<vmem>>, vector<8x8xf32>
    %cst_107 = arith.constant dense<0.000000e+00> : vector<8x8xf32>
    %144 = tpu.matmul %126, %143, %cst_107 {dimension_numbers = #tpu.dot_dimension_numbers<[1], [0], [0], [1], [0, 0, 1, 1], [], []>} : vector<8x8xf32>, vector<8x8xf32>, vector<8x8xf32> -> vector<8x8xf32>
    %145 = vector.extract_strided_slice %144 {offsets = [0, 0], sizes = [1, 8], strides = [1, 1]} : vector<8x8xf32> to vector<1x8xf32>
    %c4_108 = arith.constant 4 : index
    %c0_109 = arith.constant 0 : index
    %146 = vector.load %arg14[%c4_108, %c0_109] : memref<8x32xf32, #tpu.memory_space<vmem>>, vector<1x8xf32>
    tpu.vector_store %arg14[%c4_108, %c0_109], %145 {strides = array<i32>} : memref<8x32xf32, #tpu.memory_space<vmem>>, vector<1x8xf32>,
    %147 = vector.extract_strided_slice %144 {offsets = [1, 0], sizes = [1, 8], strides = [1, 1]} : vector<8x8xf32> to vector<1x8xf32>
    %c4_110 = arith.constant 4 : index
    %c8_111 = arith.constant 8 : index
    %148 = vector.load %arg14[%c4_110, %c8_111] : memref<8x32xf32, #tpu.memory_space<vmem>>, vector<1x8xf32>
    tpu.vector_store %arg14[%c4_110, %c8_111], %147 {strides = array<i32>} : memref<8x32xf32, #tpu.memory_space<vmem>>, vector<1x8xf32>,
    %149 = vector.extract_strided_slice %144 {offsets = [2, 0], sizes = [1, 8], strides = [1, 1]} : vector<8x8xf32> to vector<1x8xf32>
    %c4_112 = arith.constant 4 : index
    %c16_113 = arith.constant 16 : index
    %150 = vector.load %arg14[%c4_112, %c16_113] : memref<8x32xf32, #tpu.memory_space<vmem>>, vector<1x8xf32>
    tpu.vector_store %arg14[%c4_112, %c16_113], %149 {strides = array<i32>} : memref<8x32xf32, #tpu.memory_space<vmem>>, vector<1x8xf32>,
    %151 = vector.extract_strided_slice %144 {offsets = [3, 0], sizes = [1, 8], strides = [1, 1]} : vector<8x8xf32> to vector<1x8xf32>
    %c4_114 = arith.constant 4 : index
    %c24_115 = arith.constant 24 : index
    %152 = vector.load %arg14[%c4_114, %c24_115] : memref<8x32xf32, #tpu.memory_space<vmem>>, vector<1x8xf32>
    tpu.vector_store %arg14[%c4_114, %c24_115], %151 {strides = array<i32>} : memref<8x32xf32, #tpu.memory_space<vmem>>, vector<1x8xf32>,
    %153 = vector.extract_strided_slice %144 {offsets = [4, 0], sizes = [1, 8], strides = [1, 1]} : vector<8x8xf32> to vector<1x8xf32>
    %c5_116 = arith.constant 5 : index
    %c0_117 = arith.constant 0 : index
    %154 = vector.load %arg14[%c5_116, %c0_117] : memref<8x32xf32, #tpu.memory_space<vmem>>, vector<1x8xf32>
    tpu.vector_store %arg14[%c5_116, %c0_117], %153 {strides = array<i32>} : memref<8x32xf32, #tpu.memory_space<vmem>>, vector<1x8xf32>,
    %155 = vector.extract_strided_slice %144 {offsets = [5, 0], sizes = [1, 8], strides = [1, 1]} : vector<8x8xf32> to vector<1x8xf32>
    %c5_118 = arith.constant 5 : index
    %c8_119 = arith.constant 8 : index
    %156 = vector.load %arg14[%c5_118, %c8_119] : memref<8x32xf32, #tpu.memory_space<vmem>>, vector<1x8xf32>
    tpu.vector_store %arg14[%c5_118, %c8_119], %155 {strides = array<i32>} : memref<8x32xf32, #tpu.memory_space<vmem>>, vector<1x8xf32>,
    %157 = vector.extract_strided_slice %144 {offsets = [6, 0], sizes = [1, 8], strides = [1, 1]} : vector<8x8xf32> to vector<1x8xf32>
    %c5_120 = arith.constant 5 : index
    %c16_121 = arith.constant 16 : index
    %158 = vector.load %arg14[%c5_120, %c16_121] : memref<8x32xf32, #tpu.memory_space<vmem>>, vector<1x8xf32>
    tpu.vector_store %arg14[%c5_120, %c16_121], %157 {strides = array<i32>} : memref<8x32xf32, #tpu.memory_space<vmem>>, vector<1x8xf32>,
    %159 = vector.extract_strided_slice %144 {offsets = [7, 0], sizes = [1, 8], strides = [1, 1]} : vector<8x8xf32> to vector<1x8xf32>
    %c5_122 = arith.constant 5 : index
    %c24_123 = arith.constant 24 : index
    %160 = vector.load %arg14[%c5_122, %c24_123] : memref<8x32xf32, #tpu.memory_space<vmem>>, vector<1x8xf32>
    tpu.vector_store %arg14[%c5_122, %c24_123], %159 {strides = array<i32>} : memref<8x32xf32, #tpu.memory_space<vmem>>, vector<1x8xf32>,
    %161 = vector.extract_strided_slice %7 {offsets = [24, 0], sizes = [8, 8], strides = [1, 1]} : vector<32x8xf32> to vector<8x8xf32>
    %162 = vector.extract_strided_slice %13 {offsets = [24, 0], sizes = [8, 8], strides = [1, 1]} : vector<32x8xf32> to vector<8x8xf32>
    %cst_124 = arith.constant dense<0.000000e+00> : vector<8x8xf32>
    %163 = tpu.matmul %161, %162, %cst_124 {dimension_numbers = #tpu.dot_dimension_numbers<[1], [1], [0], [0], [0, 0, 1, 0], [], []>} : vector<8x8xf32>, vector<8x8xf32>, vector<8x8xf32> -> vector<8x8xf32>
    %cst_125 = arith.constant dense<0xFF800000> : vector<8xf32>
    %164 = vector.multi_reduction <maximumf>, %163, %cst_125 [1] : vector<8x8xf32> to vector<8xf32>
    %165 = vector.shape_cast %164 : vector<8xf32> to vector<8x1xf32>
    %166 = vector.broadcast %165 : vector<8x1xf32> to vector<8x8xf32>
    %167 = arith.subf %163, %166 : vector<8x8xf32>
    %168 = math.exp %167 : vector<8x8xf32>
    %cst_126 = arith.constant dense<0.000000e+00> : vector<8xf32>
    %169 = vector.multi_reduction <add>, %168, %cst_126 [1] : vector<8x8xf32> to vector<8xf32>
    %170 = vector.shape_cast %169 : vector<8xf32> to vector<8x1xf32>
    %171 = tpu.reciprocal %170 {approx = true} : vector<8x1xf32> -> vector<8x1xf32>
    %172 = vector.broadcast %171 : vector<8x1xf32> to vector<8x8xf32>
    %173 = arith.mulf %168, %172 : vector<8x8xf32>
    %174 = vector.extract_strided_slice %19 {offsets = [6, 0], sizes = [1, 8], strides = [1, 1]} : vector<8x32xf32> to vector<1x8xf32>
    %c0_127 = arith.constant 0 : index
    %c0_128 = arith.constant 0 : index
    %175 = vector.load %arg13[%c0_127, %c0_128] : memref<8x8xf32, #tpu.memory_space<vmem>>, vector<1x8xf32>
    tpu.vector_store %arg13[%c0_127, %c0_128], %174 {strides = array<i32>} : memref<8x8xf32, #tpu.memory_space<vmem>>, vector<1x8xf32>,
    %176 = vector.extract_strided_slice %19 {offsets = [6, 8], sizes = [1, 8], strides = [1, 1]} : vector<8x32xf32> to vector<1x8xf32>
    %c1_129 = arith.constant 1 : index
    %c0_130 = arith.constant 0 : index
    %177 = vector.load %arg13[%c1_129, %c0_130] : memref<8x8xf32, #tpu.memory_space<vmem>>, vector<1x8xf32>
    tpu.vector_store %arg13[%c1_129, %c0_130], %176 {strides = array<i32>} : memref<8x8xf32, #tpu.memory_space<vmem>>, vector<1x8xf32>,
    %178 = vector.extract_strided_slice %19 {offsets = [6, 16], sizes = [1, 8], strides = [1, 1]} : vector<8x32xf32> to vector<1x8xf32>
    %c2_131 = arith.constant 2 : index
    %c0_132 = arith.constant 0 : index
    %179 = vector.load %arg13[%c2_131, %c0_132] : memref<8x8xf32, #tpu.memory_space<vmem>>, vector<1x8xf32>
    tpu.vector_store %arg13[%c2_131, %c0_132], %178 {strides = array<i32>} : memref<8x8xf32, #tpu.memory_space<vmem>>, vector<1x8xf32>,
    %180 = vector.extract_strided_slice %19 {offsets = [6, 24], sizes = [1, 8], strides = [1, 1]} : vector<8x32xf32> to vector<1x8xf32>
    %c3_133 = arith.constant 3 : index
    %c0_134 = arith.constant 0 : index
    %181 = vector.load %arg13[%c3_133, %c0_134] : memref<8x8xf32, #tpu.memory_space<vmem>>, vector<1x8xf32>
    tpu.vector_store %arg13[%c3_133, %c0_134], %180 {strides = array<i32>} : memref<8x8xf32, #tpu.memory_space<vmem>>, vector<1x8xf32>,
    %182 = vector.extract_strided_slice %19 {offsets = [7, 0], sizes = [1, 8], strides = [1, 1]} : vector<8x32xf32> to vector<1x8xf32>
    %c4_135 = arith.constant 4 : index
    %c0_136 = arith.constant 0 : index
    %183 = vector.load %arg13[%c4_135, %c0_136] : memref<8x8xf32, #tpu.memory_space<vmem>>, vector<1x8xf32>
    tpu.vector_store %arg13[%c4_135, %c0_136], %182 {strides = array<i32>} : memref<8x8xf32, #tpu.memory_space<vmem>>, vector<1x8xf32>,
    %184 = vector.extract_strided_slice %19 {offsets = [7, 8], sizes = [1, 8], strides = [1, 1]} : vector<8x32xf32> to vector<1x8xf32>
    %c5_137 = arith.constant 5 : index
    %c0_138 = arith.constant 0 : index
    %185 = vector.load %arg13[%c5_137, %c0_138] : memref<8x8xf32, #tpu.memory_space<vmem>>, vector<1x8xf32>
    tpu.vector_store %arg13[%c5_137, %c0_138], %184 {strides = array<i32>} : memref<8x8xf32, #tpu.memory_space<vmem>>, vector<1x8xf32>,
    %186 = vector.extract_strided_slice %19 {offsets = [7, 16], sizes = [1, 8], strides = [1, 1]} : vector<8x32xf32> to vector<1x8xf32>
    %c6_139 = arith.constant 6 : index
    %c0_140 = arith.constant 0 : index
    %187 = vector.load %arg13[%c6_139, %c0_140] : memref<8x8xf32, #tpu.memory_space<vmem>>, vector<1x8xf32>
    tpu.vector_store %arg13[%c6_139, %c0_140], %186 {strides = array<i32>} : memref<8x8xf32, #tpu.memory_space<vmem>>, vector<1x8xf32>,
    %188 = vector.extract_strided_slice %19 {offsets = [7, 24], sizes = [1, 8], strides = [1, 1]} : vector<8x32xf32> to vector<1x8xf32>
    %c7_141 = arith.constant 7 : index
    %c0_142 = arith.constant 0 : index
    %189 = vector.load %arg13[%c7_141, %c0_142] : memref<8x8xf32, #tpu.memory_space<vmem>>, vector<1x8xf32>
    tpu.vector_store %arg13[%c7_141, %c0_142], %188 {strides = array<i32>} : memref<8x8xf32, #tpu.memory_space<vmem>>, vector<1x8xf32>,
    %c0_143 = arith.constant 0 : index
    %c0_144 = arith.constant 0 : index
    %190 = vector.load %arg13[%c0_143, %c0_144] : memref<8x8xf32, #tpu.memory_space<vmem>>, vector<8x8xf32>
    %cst_145 = arith.constant dense<0.000000e+00> : vector<8x8xf32>
    %191 = tpu.matmul %173, %190, %cst_145 {dimension_numbers = #tpu.dot_dimension_numbers<[1], [0], [0], [1], [0, 0, 1, 1], [], []>} : vector<8x8xf32>, vector<8x8xf32>, vector<8x8xf32> -> vector<8x8xf32>
    %192 = vector.extract_strided_slice %191 {offsets = [0, 0], sizes = [1, 8], strides = [1, 1]} : vector<8x8xf32> to vector<1x8xf32>
    %c6_146 = arith.constant 6 : index
    %c0_147 = arith.constant 0 : index
    %193 = vector.load %arg14[%c6_146, %c0_147] : memref<8x32xf32, #tpu.memory_space<vmem>>, vector<1x8xf32>
    tpu.vector_store %arg14[%c6_146, %c0_147], %192 {strides = array<i32>} : memref<8x32xf32, #tpu.memory_space<vmem>>, vector<1x8xf32>,
    %194 = vector.extract_strided_slice %191 {offsets = [1, 0], sizes = [1, 8], strides = [1, 1]} : vector<8x8xf32> to vector<1x8xf32>
    %c6_148 = arith.constant 6 : index
    %c8_149 = arith.constant 8 : index
    %195 = vector.load %arg14[%c6_148, %c8_149] : memref<8x32xf32, #tpu.memory_space<vmem>>, vector<1x8xf32>
    tpu.vector_store %arg14[%c6_148, %c8_149], %194 {strides = array<i32>} : memref<8x32xf32, #tpu.memory_space<vmem>>, vector<1x8xf32>,
    %196 = vector.extract_strided_slice %191 {offsets = [2, 0], sizes = [1, 8], strides = [1, 1]} : vector<8x8xf32> to vector<1x8xf32>
    %c6_150 = arith.constant 6 : index
    %c16_151 = arith.constant 16 : index
    %197 = vector.load %arg14[%c6_150, %c16_151] : memref<8x32xf32, #tpu.memory_space<vmem>>, vector<1x8xf32>
    tpu.vector_store %arg14[%c6_150, %c16_151], %196 {strides = array<i32>} : memref<8x32xf32, #tpu.memory_space<vmem>>, vector<1x8xf32>,
    %198 = vector.extract_strided_slice %191 {offsets = [3, 0], sizes = [1, 8], strides = [1, 1]} : vector<8x8xf32> to vector<1x8xf32>
    %c6_152 = arith.constant 6 : index
    %c24_153 = arith.constant 24 : index
    %199 = vector.load %arg14[%c6_152, %c24_153] : memref<8x32xf32, #tpu.memory_space<vmem>>, vector<1x8xf32>
    tpu.vector_store %arg14[%c6_152, %c24_153], %198 {strides = array<i32>} : memref<8x32xf32, #tpu.memory_space<vmem>>, vector<1x8xf32>,
    %200 = vector.extract_strided_slice %191 {offsets = [4, 0], sizes = [1, 8], strides = [1, 1]} : vector<8x8xf32> to vector<1x8xf32>
    %c7_154 = arith.constant 7 : index
    %c0_155 = arith.constant 0 : index
    %201 = vector.load %arg14[%c7_154, %c0_155] : memref<8x32xf32, #tpu.memory_space<vmem>>, vector<1x8xf32>
    tpu.vector_store %arg14[%c7_154, %c0_155], %200 {strides = array<i32>} : memref<8x32xf32, #tpu.memory_space<vmem>>, vector<1x8xf32>,
    %202 = vector.extract_strided_slice %191 {offsets = [5, 0], sizes = [1, 8], strides = [1, 1]} : vector<8x8xf32> to vector<1x8xf32>
    %c7_156 = arith.constant 7 : index
    %c8_157 = arith.constant 8 : index
    %203 = vector.load %arg14[%c7_156, %c8_157] : memref<8x32xf32, #tpu.memory_space<vmem>>, vector<1x8xf32>
    tpu.vector_store %arg14[%c7_156, %c8_157], %202 {strides = array<i32>} : memref<8x32xf32, #tpu.memory_space<vmem>>, vector<1x8xf32>,
    %204 = vector.extract_strided_slice %191 {offsets = [6, 0], sizes = [1, 8], strides = [1, 1]} : vector<8x8xf32> to vector<1x8xf32>
    %c7_158 = arith.constant 7 : index
    %c16_159 = arith.constant 16 : index
    %205 = vector.load %arg14[%c7_158, %c16_159] : memref<8x32xf32, #tpu.memory_space<vmem>>, vector<1x8xf32>
    tpu.vector_store %arg14[%c7_158, %c16_159], %204 {strides = array<i32>} : memref<8x32xf32, #tpu.memory_space<vmem>>, vector<1x8xf32>,
    %206 = vector.extract_strided_slice %191 {offsets = [7, 0], sizes = [1, 8], strides = [1, 1]} : vector<8x8xf32> to vector<1x8xf32>
    %c7_160 = arith.constant 7 : index
    %c24_161 = arith.constant 24 : index
    %207 = vector.load %arg14[%c7_160, %c24_161] : memref<8x32xf32, #tpu.memory_space<vmem>>, vector<1x8xf32>
    tpu.vector_store %arg14[%c7_160, %c24_161], %206 {strides = array<i32>} : memref<8x32xf32, #tpu.memory_space<vmem>>, vector<1x8xf32>,
    %c0_162 = arith.constant 0 : index
    %c0_163 = arith.constant 0 : index
    %208 = vector.load %arg14[%c0_162, %c0_163] : memref<8x32xf32, #tpu.memory_space<vmem>>, vector<8x32xf32>
    %c0_164 = arith.constant 0 : index
    %c0_165 = arith.constant 0 : index
    %209 = vector.load %arg7[%c0_164, %c0_165] : memref<32x32xf32, #tpu.memory_space<vmem>>, vector<32x32xf32>
    %cst_166 = arith.constant dense<0.000000e+00> : vector<8x32xf32>
    %210 = tpu.matmul %208, %209, %cst_166 {dimension_numbers = #tpu.dot_dimension_numbers<[1], [1], [0], [0], [0, 0, 1, 0], [], []>} : vector<8x32xf32>, vector<32x32xf32>, vector<8x32xf32> -> vector<8x32xf32>
    %c0_167 = arith.constant 0 : index
    %c0_168 = arith.constant 0 : index
    %211 = vector.load %arg11[%c0_167, %c0_168] : memref<1x32xf32, #tpu.memory_space<vmem>>, vector<1x32xf32>
    %212 = vector.broadcast %211 : vector<1x32xf32> to vector<8x32xf32>
    %213 = arith.addf %210, %212 : vector<8x32xf32>
    %c0_169 = arith.constant 0 : index
    %c0_170 = arith.constant 0 : index
    %214 = vector.load %arg12[%c0_169, %c0_170] : memref<8x32xf32, #tpu.memory_space<vmem>>, vector<8x32xf32>
    tpu.vector_store %arg12[%c0_169, %c0_170], %213 {strides = array<i32>} : memref<8x32xf32, #tpu.memory_space<vmem>>, vector<8x32xf32>,
    return
  }
  func.func @transform_0(%arg0: i32) -> (i32, i32) {
    %c0_i32 = arith.constant 0 : i32
    %c0_i32_0 = arith.constant 0 : i32
    %c0_i32_1 = arith.constant 0 : i32
    return %c0_i32, %c0_i32_0 : i32, i32
  }
  func.func @transform_1(%arg0: i32) -> (i32, i32) {
    %c0_i32 = arith.constant 0 : i32
    %c0_i32_0 = arith.constant 0 : i32
    %c0_i32_1 = arith.constant 0 : i32
    return %c0_i32, %c0_i32_0 : i32, i32
  }
  func.func @transform_2(%arg0: i32) -> (i32, i32) {
    %c0_i32 = arith.constant 0 : i32
    %c0_i32_0 = arith.constant 0 : i32
    %c0_i32_1 = arith.constant 0 : i32
    return %c0_i32, %c0_i32_0 : i32, i32
  }
  func.func @transform_3(%arg0: i32) -> (i32, i32) {
    %c0_i32 = arith.constant 0 : i32
    %c0_i32_0 = arith.constant 0 : i32
    %c0_i32_1 = arith.constant 0 : i32
    return %c0_i32, %c0_i32_0 : i32, i32
  }
  func.func @transform_4(%arg0: i32) -> (i32, i32) {
    %c0_i32 = arith.constant 0 : i32
    %c0_i32_0 = arith.constant 0 : i32
    %c0_i32_1 = arith.constant 0 : i32
    return %c0_i32, %c0_i32_0 : i32, i32
  }
  func.func @transform_5(%arg0: i32) -> (i32, i32) {
    %c0_i32 = arith.constant 0 : i32
    %c0_i32_0 = arith.constant 0 : i32
    %c0_i32_1 = arith.constant 0 : i32
    return %c0_i32, %c0_i32_0 : i32, i32
  }
  func.func @transform_6(%arg0: i32) -> (i32, i32) {
    %c0_i32 = arith.constant 0 : i32
    %c0_i32_0 = arith.constant 0 : i32
    %c0_i32_1 = arith.constant 0 : i32
    return %c0_i32, %c0_i32_0 : i32, i32
  }
  func.func @transform_7(%arg0: i32) -> (i32, i32) {
    %c0_i32 = arith.constant 0 : i32
    %c0_i32_0 = arith.constant 0 : i32
    %c0_i32_1 = arith.constant 0 : i32
    return %c0_i32, %c0_i32_0 : i32, i32
  }
  func.func @transform_8(%arg0: i32) -> (i32, i32) {
    %c0_i32 = arith.constant 0 : i32
    %c0_i32_0 = arith.constant 0 : i32
    %c0_i32_1 = arith.constant 0 : i32
    return %c0_i32, %c0_i32_0 : i32, i32
  }
  func.func @transform_9(%arg0: i32) -> (i32, i32) {
    %c0_i32 = arith.constant 0 : i32
    %c0_i32_0 = arith.constant 0 : i32
    %c0_i32_1 = arith.constant 0 : i32
    return %c0_i32, %c0_i32_0 : i32, i32
  }
  func.func @transform_10(%arg0: i32) -> (i32, i32) {
    %c0_i32 = arith.constant 0 : i32
    %c0_i32_0 = arith.constant 0 : i32
    %c0_i32_1 = arith.constant 0 : i32
    return %c0_i32, %c0_i32_0 : i32, i32
  }
  func.func @transform_11(%arg0: i32) -> (i32, i32) {
    %c0_i32 = arith.constant 0 : i32
    %c0_i32_0 = arith.constant 0 : i32
    %c0_i32_1 = arith.constant 0 : i32
    return %c0_i32, %c0_i32_0 : i32, i32
  }
}

</mosaic_0001>

<llo_original>
// kernel: multi_head_attention.1
$region0: #{multi_head_attention.1}
  #allocation0 [shape = 'u32[]', space=smem, size = 0x4, offset = 0x4, fixed_abs, tag = 'smem constant byte address 0x4 - core index']
  #allocation1 [shape = 'u32[144,128]{1,0:T(1,128)}', space=vmem, size = 0x12000, scoped, tag = 'internal scratch']
  #allocation2 [shape = 'f32[8,8]{1,0:T(8,128)}', space=vmem, size = 0x1000, scoped, tag = 'scratch operand']
  #allocation3 [shape = 'f32[8,32]{1,0:T(8,128)}', space=vmem, size = 0x1000, scoped, tag = 'scratch operand']
  %s0 = inlined_call_operand.hbm [shape: f32[8,32], index: 0, kind: input, shape index: {}]
  %s1 = inlined_call_operand.hbm [shape: f32[8,32], index: 1, kind: input, shape index: {}]
  %s2 = inlined_call_operand.hbm [shape: f32[8,32], index: 2, kind: input, shape index: {}]
  %s3 = inlined_call_operand.vmem [shape: f32[32,32], index: 3, kind: input, shape index: {}]
  %s4 = inlined_call_operand.vmem [shape: f32[32,32], index: 4, kind: input, shape index: {}]
  %s5 = inlined_call_operand.vmem [shape: f32[32,32], index: 5, kind: input, shape index: {}]
  %s6 = inlined_call_operand.hbm [shape: f32[32,32], index: 6, kind: input, shape index: {}]
  %s7 = inlined_call_operand.vmem [shape: f32[32,1], index: 7, kind: input, shape index: {}]
  %s8 = inlined_call_operand.vmem [shape: f32[32,1], index: 8, kind: input, shape index: {}]
  %s9 = inlined_call_operand.vmem [shape: f32[1,32], index: 9, kind: input, shape index: {}]
  %s10 = inlined_call_operand.hbm [shape: f32[1,32], index: 10, kind: input, shape index: {}]
  %s11 = inlined_call_operand.hbm [shape: f32[8,32], index: 11, kind: output, shape index: {}]
  %s12 = sld [smem:[#allocation0]]
  $region74: #{multi_head_attention.1} parent=0
    _
  %s14 = ssub.s32 1, %s12
  %s15 = scalar_select 0, %s14, %s12
  $region1: #{multi_head_attention.1} parent=0
    #allocation4 [shape = 'u8[4096]{0}', space=vmem, size = 0x1000, scoped, tag = 'input window, operand 0, single buffered']
    #allocation5 [shape = 's32[1]{0}', space=sflag, size = 0x4, scoped, tag = 'scoped memory for multi_head_attention.1']
    #allocation6 [shape = 's32[1]{0}', space=sflag, size = 0x4, scoped, tag = 'scoped memory for multi_head_attention.1']
    #allocation7 [shape = 'u8[4096]{0}', space=vmem, size = 0x1000, scoped, tag = 'input window, operand 1, single buffered']
    #allocation8 [shape = 's32[1]{0}', space=sflag, size = 0x4, scoped, tag = 'scoped memory for multi_head_attention.1']
    #allocation9 [shape = 'u8[4096]{0}', space=vmem, size = 0x1000, scoped, tag = 'input window, operand 2, single buffered']
    #allocation10 [shape = 'u8[16384]{0}', space=vmem, size = 0x4000, scoped, tag = 'input window, operand 6, single buffered']
    #allocation11 [shape = 's32[1]{0}', space=sflag, size = 0x4, scoped, tag = 'scoped memory for multi_head_attention.1']
    #allocation12 [shape = 'u8[512]{0}', space=vmem, size = 0x400, scoped, tag = 'input window, operand 10, single buffered']
    #allocation13 [shape = 'u8[4096]{0}', space=vmem, size = 0x1000, scoped, tag = 'output window, operand 0, single buffered']
    %16 = vsyncpa [#allocation5], 0
    %17 = vsyncpa [#allocation8], 0
    %18 = vsyncpa [#allocation11], 0
    %19 = vsyncpa [#allocation6], 0
    // Predicated region
    $region2: #{multi_head_attention.1} parent=1 // pred_check
      _
    $region3: #{multi_head_attention.1} parent=1 // pred_check_branch
      %21 = sbr.rel (0) target = $region5
    $region4: #{multi_head_attention.1} parent=1 // pred_region
      %s23 = ssub.s32 128, 128
      %24 = vsyncadd [#allocation5], %s23
      %s26 = sshll.u32 [#allocation4], 4
      %s27 = int_to_ptr.vmem [resolvable:$true] %s26
      %29 = dma.hbm_to_vmem [thread:$0]  %s0, 128, %s27, [#allocation5]
    $region5: #{multi_head_attention.1} parent=1 // pred_fallthru
      _
    // Predicated region
    $region6: #{multi_head_attention.1} parent=1 // pred_check
      _
    $region7: #{multi_head_attention.1} parent=1 // pred_check_branch
      %31 = sbr.rel (0) target = $region9
    $region8: #{multi_head_attention.1} parent=1 // pred_region
      %s33 = ssub.s32 128, 128
      %34 = vsyncadd [#allocation8], %s33
      %s36 = sshll.u32 [#allocation7], 4
      %s37 = int_to_ptr.vmem [resolvable:$true] %s36
      %39 = dma.hbm_to_vmem [thread:$0]  %s1, 128, %s37, [#allocation8]
    $region9: #{multi_head_attention.1} parent=1 // pred_fallthru
      _
    // Predicated region
    $region10: #{multi_head_attention.1} parent=1 // pred_check
      _
    $region11: #{multi_head_attention.1} parent=1 // pred_check_branch
      %41 = sbr.rel (0) target = $region13
    $region12: #{multi_head_attention.1} parent=1 // pred_region
      %s43 = ssub.s32 128, 128
      %44 = vsyncadd [#allocation8], %s43
      %s46 = sshll.u32 [#allocation9], 4
      %s47 = int_to_ptr.vmem [resolvable:$true] %s46
      %49 = dma.hbm_to_vmem [thread:$0]  %s2, 128, %s47, [#allocation8]
    $region13: #{multi_head_attention.1} parent=1 // pred_fallthru
      _
    // Predicated region
    $region14: #{multi_head_attention.1} parent=1 // pred_check
      _
    $region15: #{multi_head_attention.1} parent=1 // pred_check_branch
      %51 = sbr.rel (0) target = $region17
    $region16: #{multi_head_attention.1} parent=1 // pred_region
      _
    $region17: #{multi_head_attention.1} parent=1 // pred_fallthru
      _
    // Predicated region
    $region18: #{multi_head_attention.1} parent=1 // pred_check
      _
    $region19: #{multi_head_attention.1} parent=1 // pred_check_branch
      %53 = sbr.rel (0) target = $region21
    $region20: #{multi_head_attention.1} parent=1 // pred_region
      _
    $region21: #{multi_head_attention.1} parent=1 // pred_fallthru
      _
    // Predicated region
    $region22: #{multi_head_attention.1} parent=1 // pred_check
      _
    $region23: #{multi_head_attention.1} parent=1 // pred_check_branch
      %55 = sbr.rel (0) target = $region25
    $region24: #{multi_head_attention.1} parent=1 // pred_region
      _
    $region25: #{multi_head_attention.1} parent=1 // pred_fallthru
      _
    // Predicated region
    $region26: #{multi_head_attention.1} parent=1 // pred_check
      _
    $region27: #{multi_head_attention.1} parent=1 // pred_check_branch
      %57 = sbr.rel (0) target = $region29
    $region28: #{multi_head_attention.1} parent=1 // pred_region
      %s59 = ssub.s32 512, 512
      %60 = vsyncadd [#allocation11], %s59
      %s61 = sshll.u32 [#allocation10], 4
      %s62 = int_to_ptr.vmem [resolvable:$true] %s61
      %67 = dma.hbm_to_vmem [thread:$0]  %s6, 512, %s62, [#allocation11], 128, 128, 8
    $region29: #{multi_head_attention.1} parent=1 // pred_fallthru
      _
    // Predicated region
    $region30: #{multi_head_attention.1} parent=1 // pred_check
      _
    $region31: #{multi_head_attention.1} parent=1 // pred_check_branch
      %69 = sbr.rel (0) target = $region33
    $region32: #{multi_head_attention.1} parent=1 // pred_region
      _
    $region33: #{multi_head_attention.1} parent=1 // pred_fallthru
      _
    // Predicated region
    $region34: #{multi_head_attention.1} parent=1 // pred_check
      _
    $region35: #{multi_head_attention.1} parent=1 // pred_check_branch
      %71 = sbr.rel (0) target = $region37
    $region36: #{multi_head_attention.1} parent=1 // pred_region
      _
    $region37: #{multi_head_attention.1} parent=1 // pred_fallthru
      _
    // Predicated region
    $region38: #{multi_head_attention.1} parent=1 // pred_check
      _
    $region39: #{multi_head_attention.1} parent=1 // pred_check_branch
      %73 = sbr.rel (0) target = $region41
    $region40: #{multi_head_attention.1} parent=1 // pred_region
      _
    $region41: #{multi_head_attention.1} parent=1 // pred_fallthru
      _
    // Predicated region
    $region42: #{multi_head_attention.1} parent=1 // pred_check
      _
    $region43: #{multi_head_attention.1} parent=1 // pred_check_branch
      %75 = sbr.rel (0) target = $region45
    $region44: #{multi_head_attention.1} parent=1 // pred_region
      %s77 = ssub.s32 16, 16
      %78 = vsyncadd [#allocation11], %s77
      %s80 = sshll.u32 [#allocation12], 4
      %s81 = int_to_ptr.vmem [resolvable:$true] %s80
      %83 = dma.hbm_to_vmem [thread:$0]  %s10, 16, %s81, [#allocation11]
    $region45: #{multi_head_attention.1} parent=1 // pred_fallthru
      _
    // Predicated region
    $region46: #{multi_head_attention.1} parent=1 // pred_check
      _
    $region47: #{multi_head_attention.1} parent=1 // pred_check_branch
      %85 = sbr.rel (0) target = $region49
    $region48: #{multi_head_attention.1} parent=1 // pred_region
      %86 = dma.done [#allocation5], 128
    $region49: #{multi_head_attention.1} parent=1 // pred_fallthru
      _
    // Predicated region
    $region50: #{multi_head_attention.1} parent=1 // pred_check
      _
    $region51: #{multi_head_attention.1} parent=1 // pred_check_branch
      %88 = sbr.rel (0) target = $region53
    $region52: #{multi_head_attention.1} parent=1 // pred_region
      %89 = dma.done [#allocation8], 128
    $region53: #{multi_head_attention.1} parent=1 // pred_fallthru
      _
    // Predicated region
    $region54: #{multi_head_attention.1} parent=1 // pred_check
      _
    $region55: #{multi_head_attention.1} parent=1 // pred_check_branch
      %91 = sbr.rel (0) target = $region57
    $region56: #{multi_head_attention.1} parent=1 // pred_region
      %92 = dma.done [#allocation8], 128
    $region57: #{multi_head_attention.1} parent=1 // pred_fallthru
      _
    // Predicated region
    $region58: #{multi_head_attention.1} parent=1 // pred_check
      _
    $region59: #{multi_head_attention.1} parent=1 // pred_check_branch
      %94 = sbr.rel (0) target = $region61
    $region60: #{multi_head_attention.1} parent=1 // pred_region
      %95 = dma.done [#allocation11], 512
    $region61: #{multi_head_attention.1} parent=1 // pred_fallthru
      _
    // Predicated region
    $region62: #{multi_head_attention.1} parent=1 // pred_check
      _
    $region63: #{multi_head_attention.1} parent=1 // pred_check_branch
      %97 = sbr.rel (0) target = $region65
    $region64: #{multi_head_attention.1} parent=1 // pred_region
      %98 = dma.done [#allocation11], 16
    $region65: #{multi_head_attention.1} parent=1 // pred_fallthru
      _
    %v99 = vld [vmem:[%s3] sm:$0xff]
    %v100 = vld [vmem:[%s3 + $0x8] sm:$0xff]
    %v101 = vld [vmem:[%s3 + $0x10] sm:$0xff]
    %v102 = vld [vmem:[%s3 + $0x18] sm:$0xff]
    %v103 = vld [vmem:[#allocation4] sm:$0xff]
    %v104 = vld [vmem:[%s7] sm:$0xff]
    %v105 = vld [vmem:[%s7 + $0x8] sm:$0xff]
    %v106 = vld [vmem:[%s7 + $0x10] sm:$0xff]
    %v107 = vld [vmem:[%s7 + $0x18] sm:$0xff]
    %109 = vset.pattern.permute.xlu0 0
    %110 = vperm.xlu0 %109, %v104
    %v111 = vpop.permute.xlu0 %110
    %114 = vset.pattern.permute.xlu0 0
    %115 = vperm.xlu0 %114, %v105
    %v116 = vpop.permute.xlu0 %115
    %119 = vset.pattern.permute.xlu0 0
    %120 = vperm.xlu0 %119, %v106
    %v121 = vpop.permute.xlu0 %120
    %124 = vset.pattern.permute.xlu0 0
    %125 = vperm.xlu0 %124, %v107
    %v126 = vpop.permute.xlu0 %125
    %vm128 = vcmask 261120
    %v130 = vsel %vm128, %v99, 0
    %v133 = vsel %vm128, %v100, 0
    %v136 = vsel %vm128, %v101, 0
    %v139 = vsel %vm128, %v102, 0
    %v142 = vsel %vm128, %v103, 0
    %144 = vmatprep.subr.mxu0 0.0
    %145 = vmatpush1.xpose.msra.mxu0 %v142
    %146 = vmatprep.subr.mxu0 0.0
    %147 = vmatpush1.xpose.msra.mxu0 0.0
    %148 = vmatprep.subr.mxu0 0.0
    %149 = vmatpush1.xpose.msra.mxu0 0.0
    %150 = vmatprep.subr.mxu0 0.0
    %151 = vmatpush1.xpose.msra.mxu0 0.0
    %152 = vmatprep.subr.mxu0 0.0
    %153 = vmatpush1.xpose.msra.mxu0 0.0
    %154 = vmatprep.subr.mxu0 0.0
    %155 = vmatpush1.xpose.msra.mxu0 0.0
    %156 = vmatprep.subr.mxu0 0.0
    %157 = vmatpush1.xpose.msra.mxu0 0.0
    %158 = vmatprep.subr.mxu0 0.0
    %159 = vmatpush1.xpose.msra.mxu0 0.0
    %160 = vmatprep.subr.mxu0 0.0
    %161 = vmatpush1.xpose.msra.mxu0 0.0
    %162 = vmatprep.subr.mxu0 0.0
    %163 = vmatpush1.xpose.msra.mxu0 0.0
    %164 = vmatprep.subr.mxu0 0.0
    %165 = vmatpush1.xpose.msra.mxu0 0.0
    %166 = vmatprep.subr.mxu0 0.0
    %167 = vmatpush1.xpose.msra.mxu0 0.0
    %168 = vmatprep.subr.mxu0 0.0
    %169 = vmatpush1.xpose.msra.mxu0 0.0
    %170 = vmatprep.subr.mxu0 0.0
    %171 = vmatpush1.xpose.msra.mxu0 0.0
    %172 = vmatprep.subr.mxu0 0.0
    %173 = vmatpush1.xpose.msra.mxu0 0.0
    %174 = vmatprep.subr.mxu0 0.0
    %175 = vmatpush1.xpose.msra.mxu0 0.0
    %176 = vmatprep.subr.mxu0 0.0
    %177 = vmatpush1.xpose.msra.mxu0 0.0
    %178 = vmatprep.subr.mxu0 0.0
    %179 = vmatpush1.xpose.msra.mxu0 0.0
    %180 = vmatprep.subr.mxu0 0.0
    %181 = vmatpush1.xpose.msra.mxu0 0.0
    %182 = vmatprep.subr.mxu0 0.0
    %183 = vmatpush1.xpose.msra.mxu0 0.0
    %184 = vmatprep.subr.mxu0 0.0
    %185 = vmatpush1.xpose.msra.mxu0 0.0
    %186 = vmatprep.subr.mxu0 0.0
    %187 = vmatpush1.xpose.msra.mxu0 0.0
    %188 = vmatprep.subr.mxu0 0.0
    %189 = vmatpush1.xpose.msra.mxu0 0.0
    %190 = vmatprep.subr.mxu0 0.0
    %191 = vmatpush1.xpose.msra.mxu0 0.0
    %192 = vmatprep.subr.mxu0 0.0
    %193 = vmatpush1.xpose.msra.mxu0 0.0
    %194 = vmatprep.subr.mxu0 0.0
    %195 = vmatpush1.xpose.msra.mxu0 0.0
    %196 = vmatprep.subr.mxu0 0.0
    %197 = vmatpush1.xpose.msra.mxu0 0.0
    %198 = vmatprep.subr.mxu0 0.0
    %199 = vmatpush1.xpose.msra.mxu0 0.0
    %200 = vmatprep.subr.mxu0 0.0
    %201 = vmatpush1.xpose.msra.mxu0 0.0
    %202 = vmatprep.subr.mxu0 0.0
    %203 = vmatpush1.xpose.msra.mxu0 0.0
    %204 = vmatprep.subr.mxu0 0.0
    %205 = vmatpush1.xpose.msra.mxu0 0.0
    %206 = vmatprep.subr.mxu0 0.0
    %207 = vmatpush1.xpose.msra.mxu0 0.0
    %208 = vmatprep.mubr.f32.mxu0 0.0
    %209 = vmatmul.mubr.f32.gmra.mrb[0].mxu0 %v130
    %v210 = vpop.f32.mrb[0].mxu0
    %v211 = vadd.f32 %v111, %v210
    %v212 = vpop.f32.mrb[0].mxu0
    %213 = vmatprep.mubr.f32.mxu0 0.0
    %214 = vmatmul.mubr.f32.gmra.mrb[0].mxu0 %v133
    %v215 = vpop.f32.mrb[0].mxu0
    %v216 = vadd.f32 %v116, %v215
    %v217 = vpop.f32.mrb[0].mxu0
    %218 = vmatprep.mubr.f32.mxu0 0.0
    %219 = vmatmul.mubr.f32.gmra.mrb[0].mxu0 %v136
    %v220 = vpop.f32.mrb[0].mxu0
    %v221 = vadd.f32 %v121, %v220
    %v222 = vpop.f32.mrb[0].mxu0
    %223 = vmatprep.mubr.f32.mxu0 0.0
    %224 = vmatmul.mubr.f32.gmra.mrb[0].mxu0 %v139
    %v225 = vpop.f32.mrb[0].mxu0
    %v226 = vadd.f32 %v126, %v225
    %v227 = vpop.f32.mrb[0].mxu0
    %228 = vdwg.mxu0
    %v229 = vmul.f32 %v211, 0.17677669
    %v230 = vmul.f32 %v216, 0.17677669
    %v231 = vmul.f32 %v221, 0.17677669
    %v232 = vmul.f32 %v226, 0.17677669
    %v233 = vld [vmem:[%s4] sm:$0xff]
    %v234 = vld [vmem:[%s4 + $0x8] sm:$0xff]
    %v235 = vld [vmem:[%s4 + $0x10] sm:$0xff]
    %v236 = vld [vmem:[%s4 + $0x18] sm:$0xff]
    %v237 = vld [vmem:[#allocation7] sm:$0xff]
    %v238 = vld [vmem:[%s8] sm:$0xff]
    %v239 = vld [vmem:[%s8 + $0x8] sm:$0xff]
    %v240 = vld [vmem:[%s8 + $0x10] sm:$0xff]
    %v241 = vld [vmem:[%s8 + $0x18] sm:$0xff]
    %243 = vset.pattern.permute.xlu0 0
    %244 = vperm.xlu0 %243, %v238
    %v245 = vpop.permute.xlu0 %244
    %248 = vset.pattern.permute.xlu0 0
    %249 = vperm.xlu0 %248, %v239
    %v250 = vpop.permute.xlu0 %249
    %253 = vset.pattern.permute.xlu0 0
    %254 = vperm.xlu0 %253, %v240
    %v255 = vpop.permute.xlu0 %254
    %258 = vset.pattern.permute.xlu0 0
    %259 = vperm.xlu0 %258, %v241
    %v260 = vpop.permute.xlu0 %259
    %v263 = vsel %vm128, %v233, 0
    %v266 = vsel %vm128, %v234, 0
    %v269 = vsel %vm128, %v235, 0
    %v272 = vsel %vm128, %v236, 0
    %v275 = vsel %vm128, %v237, 0
    %277 = vmatprep.subr.mxu0 0.0
    %278 = vmatpush1.xpose.msra.mxu0 %v275
    %279 = vmatprep.subr.mxu0 0.0
    %280 = vmatpush1.xpose.msra.mxu0 0.0
    %281 = vmatprep.subr.mxu0 0.0
    %282 = vmatpush1.xpose.msra.mxu0 0.0
    %283 = vmatprep.subr.mxu0 0.0
    %284 = vmatpush1.xpose.msra.mxu0 0.0
    %285 = vmatprep.subr.mxu0 0.0
    %286 = vmatpush1.xpose.msra.mxu0 0.0
    %287 = vmatprep.subr.mxu0 0.0
    %288 = vmatpush1.xpose.msra.mxu0 0.0
    %289 = vmatprep.subr.mxu0 0.0
    %290 = vmatpush1.xpose.msra.mxu0 0.0
    %291 = vmatprep.subr.mxu0 0.0
    %292 = vmatpush1.xpose.msra.mxu0 0.0
    %293 = vmatprep.subr.mxu0 0.0
    %294 = vmatpush1.xpose.msra.mxu0 0.0
    %295 = vmatprep.subr.mxu0 0.0
    %296 = vmatpush1.xpose.msra.mxu0 0.0
    %297 = vmatprep.subr.mxu0 0.0
    %298 = vmatpush1.xpose.msra.mxu0 0.0
    %299 = vmatprep.subr.mxu0 0.0
    %300 = vmatpush1.xpose.msra.mxu0 0.0
    %301 = vmatprep.subr.mxu0 0.0
    %302 = vmatpush1.xpose.msra.mxu0 0.0
    %303 = vmatprep.subr.mxu0 0.0
    %304 = vmatpush1.xpose.msra.mxu0 0.0
    %305 = vmatprep.subr.mxu0 0.0
    %306 = vmatpush1.xpose.msra.mxu0 0.0
    %307 = vmatprep.subr.mxu0 0.0
    %308 = vmatpush1.xpose.msra.mxu0 0.0
    %309 = vmatprep.subr.mxu0 0.0
    %310 = vmatpush1.xpose.msra.mxu0 0.0
    %311 = vmatprep.subr.mxu0 0.0
    %312 = vmatpush1.xpose.msra.mxu0 0.0
    %313 = vmatprep.subr.mxu0 0.0
    %314 = vmatpush1.xpose.msra.mxu0 0.0
    %315 = vmatprep.subr.mxu0 0.0
    %316 = vmatpush1.xpose.msra.mxu0 0.0
    %317 = vmatprep.subr.mxu0 0.0
    %318 = vmatpush1.xpose.msra.mxu0 0.0
    %319 = vmatprep.subr.mxu0 0.0
    %320 = vmatpush1.xpose.msra.mxu0 0.0
    %321 = vmatprep.subr.mxu0 0.0
    %322 = vmatpush1.xpose.msra.mxu0 0.0
    %323 = vmatprep.subr.mxu0 0.0
    %324 = vmatpush1.xpose.msra.mxu0 0.0
    %325 = vmatprep.subr.mxu0 0.0
    %326 = vmatpush1.xpose.msra.mxu0 0.0
    %327 = vmatprep.subr.mxu0 0.0
    %328 = vmatpush1.xpose.msra.mxu0 0.0
    %329 = vmatprep.subr.mxu0 0.0
    %330 = vmatpush1.xpose.msra.mxu0 0.0
    %331 = vmatprep.subr.mxu0 0.0
    %332 = vmatpush1.xpose.msra.mxu0 0.0
    %333 = vmatprep.subr.mxu0 0.0
    %334 = vmatpush1.xpose.msra.mxu0 0.0
    %335 = vmatprep.subr.mxu0 0.0
    %336 = vmatpush1.xpose.msra.mxu0 0.0
    %337 = vmatprep.subr.mxu0 0.0
    %338 = vmatpush1.xpose.msra.mxu0 0.0
    %339 = vmatprep.subr.mxu0 0.0
    %340 = vmatpush1.xpose.msra.mxu0 0.0
    %341 = vmatprep.mubr.f32.mxu0 0.0
    %342 = vmatmul.mubr.f32.gmra.mrb[0].mxu0 %v263
    %v343 = vpop.f32.mrb[0].mxu0
    %v344 = vadd.f32 %v245, %v343
    %v345 = vpop.f32.mrb[0].mxu0
    %346 = vmatprep.mubr.f32.mxu0 0.0
    %347 = vmatmul.mubr.f32.gmra.mrb[0].mxu0 %v266
    %v348 = vpop.f32.mrb[0].mxu0
    %v349 = vadd.f32 %v250, %v348
    %v350 = vpop.f32.mrb[0].mxu0
    %351 = vmatprep.mubr.f32.mxu0 0.0
    %352 = vmatmul.mubr.f32.gmra.mrb[0].mxu0 %v269
    %v353 = vpop.f32.mrb[0].mxu0
    %v354 = vadd.f32 %v255, %v353
    %v355 = vpop.f32.mrb[0].mxu0
    %356 = vmatprep.mubr.f32.mxu0 0.0
    %357 = vmatmul.mubr.f32.gmra.mrb[0].mxu0 %v272
    %v358 = vpop.f32.mrb[0].mxu0
    %v359 = vadd.f32 %v260, %v358
    %v360 = vpop.f32.mrb[0].mxu0
    %361 = vdwg.mxu0
    %v362 = vld [vmem:[#allocation9] sm:$0xff]
    %v363 = vld [vmem:[%s5] sm:$0xff]
    %v364 = vld [vmem:[%s5 + $0x8] sm:$0xff]
    %v365 = vld [vmem:[%s5 + $0x10] sm:$0xff]
    %v366 = vld [vmem:[%s5 + $0x18] sm:$0xff]
    %v367 = vld [vmem:[%s9] sm:$0x1]
    %v369 = vlaneseq
    %v370 = vshrl.u32 %v369, 7
    %v371 = vsub.s32 0, %v370
    %v372 = vrot.slane %v367, %v371
    %v375 = vsel %vm128, %v362, 0
    %v378 = vsel %vm128, %v363, 0
    %v381 = vsel %vm128, %v364, 0
    %v384 = vsel %vm128, %v365, 0
    %v387 = vsel %vm128, %v366, 0
    %389 = vmatprep.subr.mxu0 0.0
    %390 = vmatpush1.xpose.msra.mxu0 %v378
    %391 = vmatprep.subr.mxu0 0.0
    %392 = vmatpush1.xpose.msra.mxu0 %v381
    %393 = vmatprep.subr.mxu0 0.0
    %394 = vmatpush1.xpose.msra.mxu0 %v384
    %395 = vmatprep.subr.mxu0 0.0
    %396 = vmatpush1.xpose.msra.mxu0 %v387
    %397 = vmatprep.subr.mxu0 0.0
    %398 = vmatpush1.xpose.msra.mxu0 0.0
    %399 = vmatprep.subr.mxu0 0.0
    %400 = vmatpush1.xpose.msra.mxu0 0.0
    %401 = vmatprep.subr.mxu0 0.0
    %402 = vmatpush1.xpose.msra.mxu0 0.0
    %403 = vmatprep.subr.mxu0 0.0
    %404 = vmatpush1.xpose.msra.mxu0 0.0
    %405 = vmatprep.subr.mxu0 0.0
    %406 = vmatpush1.xpose.msra.mxu0 0.0
    %407 = vmatprep.subr.mxu0 0.0
    %408 = vmatpush1.xpose.msra.mxu0 0.0
    %409 = vmatprep.subr.mxu0 0.0
    %410 = vmatpush1.xpose.msra.mxu0 0.0
    %411 = vmatprep.subr.mxu0 0.0
    %412 = vmatpush1.xpose.msra.mxu0 0.0
    %413 = vmatprep.subr.mxu0 0.0
    %414 = vmatpush1.xpose.msra.mxu0 0.0
    %415 = vmatprep.subr.mxu0 0.0
    %416 = vmatpush1.xpose.msra.mxu0 0.0
    %417 = vmatprep.subr.mxu0 0.0
    %418 = vmatpush1.xpose.msra.mxu0 0.0
    %419 = vmatprep.subr.mxu0 0.0
    %420 = vmatpush1.xpose.msra.mxu0 0.0
    %421 = vmatprep.subr.mxu0 0.0
    %422 = vmatpush1.xpose.msra.mxu0 0.0
    %423 = vmatprep.subr.mxu0 0.0
    %424 = vmatpush1.xpose.msra.mxu0 0.0
    %425 = vmatprep.subr.mxu0 0.0
    %426 = vmatpush1.xpose.msra.mxu0 0.0
    %427 = vmatprep.subr.mxu0 0.0
    %428 = vmatpush1.xpose.msra.mxu0 0.0
    %429 = vmatprep.subr.mxu0 0.0
    %430 = vmatpush1.xpose.msra.mxu0 0.0
    %431 = vmatprep.subr.mxu0 0.0
    %432 = vmatpush1.xpose.msra.mxu0 0.0
    %433 = vmatprep.subr.mxu0 0.0
    %434 = vmatpush1.xpose.msra.mxu0 0.0
    %435 = vmatprep.subr.mxu0 0.0
    %436 = vmatpush1.xpose.msra.mxu0 0.0
    %437 = vmatprep.subr.mxu0 0.0
    %438 = vmatpush1.xpose.msra.mxu0 0.0
    %439 = vmatprep.subr.mxu0 0.0
    %440 = vmatpush1.xpose.msra.mxu0 0.0
    %441 = vmatprep.subr.mxu0 0.0
    %442 = vmatpush1.xpose.msra.mxu0 0.0
    %443 = vmatprep.subr.mxu0 0.0
    %444 = vmatpush1.xpose.msra.mxu0 0.0
    %445 = vmatprep.subr.mxu0 0.0
    %446 = vmatpush1.xpose.msra.mxu0 0.0
    %447 = vmatprep.subr.mxu0 0.0
    %448 = vmatpush1.xpose.msra.mxu0 0.0
    %449 = vmatprep.subr.mxu0 0.0
    %450 = vmatpush1.xpose.msra.mxu0 0.0
    %451 = vmatprep.subr.mxu0 0.0
    %452 = vmatpush1.xpose.msra.mxu0 0.0
    %453 = vmatprep.mubr.f32.mxu0 0.0
    %454 = vmatmul.mubr.f32.gmra.mrb[0].mxu0 %v375
    %v455 = vpop.f32.mrb[0].mxu0
    %v456 = vadd.f32 %v372, %v455
    %v457 = vpop.f32.mrb[0].mxu0
    %458 = vdwg.mxu0
    %vm459 = vcmask 64512
    %v461 = vsel %vm459, %v229, 0
    %v464 = vsel %vm459, %v344, 0
    %466 = vmatprep.subr.mxu0 0.0
    %467 = vmatpush1.xpose.msra.mxu0 %v464
    %468 = vmatprep.subr.mxu0 0.0
    %469 = vmatpush1.xpose.msra.mxu0 0.0
    %470 = vmatprep.subr.mxu0 0.0
    %471 = vmatpush1.xpose.msra.mxu0 0.0
    %472 = vmatprep.subr.mxu0 0.0
    %473 = vmatpush1.xpose.msra.mxu0 0.0
    %474 = vmatprep.subr.mxu0 0.0
    %475 = vmatpush1.xpose.msra.mxu0 0.0
    %476 = vmatprep.subr.mxu0 0.0
    %477 = vmatpush1.xpose.msra.mxu0 0.0
    %478 = vmatprep.subr.mxu0 0.0
    %479 = vmatpush1.xpose.msra.mxu0 0.0
    %480 = vmatprep.subr.mxu0 0.0
    %481 = vmatpush1.xpose.msra.mxu0 0.0
    %482 = vmatprep.subr.mxu0 0.0
    %483 = vmatpush1.xpose.msra.mxu0 0.0
    %484 = vmatprep.subr.mxu0 0.0
    %485 = vmatpush1.xpose.msra.mxu0 0.0
    %486 = vmatprep.subr.mxu0 0.0
    %487 = vmatpush1.xpose.msra.mxu0 0.0
    %488 = vmatprep.subr.mxu0 0.0
    %489 = vmatpush1.xpose.msra.mxu0 0.0
    %490 = vmatprep.subr.mxu0 0.0
    %491 = vmatpush1.xpose.msra.mxu0 0.0
    %492 = vmatprep.subr.mxu0 0.0
    %493 = vmatpush1.xpose.msra.mxu0 0.0
    %494 = vmatprep.subr.mxu0 0.0
    %495 = vmatpush1.xpose.msra.mxu0 0.0
    %496 = vmatprep.subr.mxu0 0.0
    %497 = vmatpush1.xpose.msra.mxu0 0.0
    %498 = vmatprep.subr.mxu0 0.0
    %499 = vmatpush1.xpose.msra.mxu0 0.0
    %500 = vmatprep.subr.mxu0 0.0
    %501 = vmatpush1.xpose.msra.mxu0 0.0
    %502 = vmatprep.subr.mxu0 0.0
    %503 = vmatpush1.xpose.msra.mxu0 0.0
    %504 = vmatprep.subr.mxu0 0.0
    %505 = vmatpush1.xpose.msra.mxu0 0.0
    %506 = vmatprep.subr.mxu0 0.0
    %507 = vmatpush1.xpose.msra.mxu0 0.0
    %508 = vmatprep.subr.mxu0 0.0
    %509 = vmatpush1.xpose.msra.mxu0 0.0
    %510 = vmatprep.subr.mxu0 0.0
    %511 = vmatpush1.xpose.msra.mxu0 0.0
    %512 = vmatprep.subr.mxu0 0.0
    %513 = vmatpush1.xpose.msra.mxu0 0.0
    %514 = vmatprep.subr.mxu0 0.0
    %515 = vmatpush1.xpose.msra.mxu0 0.0
    %516 = vmatprep.subr.mxu0 0.0
    %517 = vmatpush1.xpose.msra.mxu0 0.0
    %518 = vmatprep.subr.mxu0 0.0
    %519 = vmatpush1.xpose.msra.mxu0 0.0
    %520 = vmatprep.subr.mxu0 0.0
    %521 = vmatpush1.xpose.msra.mxu0 0.0
    %522 = vmatprep.subr.mxu0 0.0
    %523 = vmatpush1.xpose.msra.mxu0 0.0
    %524 = vmatprep.subr.mxu0 0.0
    %525 = vmatpush1.xpose.msra.mxu0 0.0
    %526 = vmatprep.subr.mxu0 0.0
    %527 = vmatpush1.xpose.msra.mxu0 0.0
    %528 = vmatprep.subr.mxu0 0.0
    %529 = vmatpush1.xpose.msra.mxu0 0.0
    %530 = vmatprep.mubr.f32.mxu0 0.0
    %531 = vmatmul.mubr.f32.gmra.mrb[0].mxu0 %v461
    %v532 = vpop.f32.mrb[0].mxu0
    %v533 = vadd.f32 0.0, %v532
    %v534 = vpop.f32.mrb[0].mxu0
    %535 = vdwg.mxu0
    %v536 = vsel %vm459, %v533, -inf
    %537 = vmax.xlane.f32.xlu0 %v536
    %v538 = vpop.xlane.xlu0 %537
    %v539 = vsub.f32 %v533, %v538
    %v540 = vmul.f32 %v539, 1.442695
    %v541 = vpow.pop %v540
    %v542 = vsel %vm459, %v541, 0.0
    %543 = vadd.xlane.f32.xlu0 %v542
    %v544 = vpop.xlane.xlu0 %543
    %v545 = vrcp.pop %v544
    %v546 = vmul.f32 %v541, %v545
    %vm547 = vcmask 57344
    %548 = vst.msk [vmem:[#allocation2] sm:$0x1] %vm547, %v456
    %550 = vrot.lane.b32.xlu0 %v456, 120
    %v551 = vpop.permute.xlu0 %550
    %553 = vst.msk [vmem:[#allocation2 + $0x1] sm:$0x1] %vm547, %v551
    %554 = vrot.lane.b32.xlu0 %v456, 112
    %v555 = vpop.permute.xlu0 %554
    %557 = vst.msk [vmem:[#allocation2 + $0x2] sm:$0x1] %vm547, %v555
    %558 = vrot.lane.b32.xlu0 %v456, 104
    %v559 = vpop.permute.xlu0 %558
    %561 = vst.msk [vmem:[#allocation2 + $0x3] sm:$0x1] %vm547, %v559
    %vm562 = vcmask 58369
    %563 = vst.msk [vmem:[#allocation2 + $0x3] sm:$0x2] %vm562, %v456
    %564 = vst.msk [vmem:[#allocation2 + $0x4] sm:$0x2] %vm562, %v551
    %565 = vst.msk [vmem:[#allocation2 + $0x5] sm:$0x2] %vm562, %v555
    %566 = vst.msk [vmem:[#allocation2 + $0x6] sm:$0x2] %vm562, %v559
    %v567 = vld [vmem:[#allocation2] sm:$0xff]
    %v569 = vsel %vm459, %v546, 0
    %571 = vmatprep.subr.mxu0 0.0
    %572 = vmatpush1.msra.mxu0 %v567
    %573 = vmatprep.subr.mxu0 0.0
    %574 = vmatpush1.msra.mxu0 0.0
    %575 = vmatprep.subr.mxu0 0.0
    %576 = vmatpush1.msra.mxu0 0.0
    %577 = vmatprep.subr.mxu0 0.0
    %578 = vmatpush1.msra.mxu0 0.0
    %579 = vmatprep.subr.mxu0 0.0
    %580 = vmatpush1.msra.mxu0 0.0
    %581 = vmatprep.subr.mxu0 0.0
    %582 = vmatpush1.msra.mxu0 0.0
    %583 = vmatprep.subr.mxu0 0.0
    %584 = vmatpush1.msra.mxu0 0.0
    %585 = vmatprep.subr.mxu0 0.0
    %586 = vmatpush1.msra.mxu0 0.0
    %587 = vmatprep.subr.mxu0 0.0
    %588 = vmatpush1.msra.mxu0 0.0
    %589 = vmatprep.subr.mxu0 0.0
    %590 = vmatpush1.msra.mxu0 0.0
    %591 = vmatprep.subr.mxu0 0.0
    %592 = vmatpush1.msra.mxu0 0.0
    %593 = vmatprep.subr.mxu0 0.0
    %594 = vmatpush1.msra.mxu0 0.0
    %595 = vmatprep.subr.mxu0 0.0
    %596 = vmatpush1.msra.mxu0 0.0
    %597 = vmatprep.subr.mxu0 0.0
    %598 = vmatpush1.msra.mxu0 0.0
    %599 = vmatprep.subr.mxu0 0.0
    %600 = vmatpush1.msra.mxu0 0.0
    %601 = vmatprep.subr.mxu0 0.0
    %602 = vmatpush1.msra.mxu0 0.0
    %603 = vmatprep.subr.mxu0 0.0
    %604 = vmatpush1.msra.mxu0 0.0
    %605 = vmatprep.subr.mxu0 0.0
    %606 = vmatpush1.msra.mxu0 0.0
    %607 = vmatprep.subr.mxu0 0.0
    %608 = vmatpush1.msra.mxu0 0.0
    %609 = vmatprep.subr.mxu0 0.0
    %610 = vmatpush1.msra.mxu0 0.0
    %611 = vmatprep.subr.mxu0 0.0
    %612 = vmatpush1.msra.mxu0 0.0
    %613 = vmatprep.subr.mxu0 0.0
    %614 = vmatpush1.msra.mxu0 0.0
    %615 = vmatprep.subr.mxu0 0.0
    %616 = vmatpush1.msra.mxu0 0.0
    %617 = vmatprep.subr.mxu0 0.0
    %618 = vmatpush1.msra.mxu0 0.0
    %619 = vmatprep.subr.mxu0 0.0
    %620 = vmatpush1.msra.mxu0 0.0
    %621 = vmatprep.subr.mxu0 0.0
    %622 = vmatpush1.msra.mxu0 0.0
    %623 = vmatprep.subr.mxu0 0.0
    %624 = vmatpush1.msra.mxu0 0.0
    %625 = vmatprep.subr.mxu0 0.0
    %626 = vmatpush1.msra.mxu0 0.0
    %627 = vmatprep.subr.mxu0 0.0
    %628 = vmatpush1.msra.mxu0 0.0
    %629 = vmatprep.subr.mxu0 0.0
    %630 = vmatpush1.msra.mxu0 0.0
    %631 = vmatprep.subr.mxu0 0.0
    %632 = vmatpush1.msra.mxu0 0.0
    %633 = vmatprep.subr.mxu0 0.0
    %634 = vmatpush1.msra.mxu0 0.0
    %635 = vmatprep.mubr.f32.mxu0 0.0
    %636 = vmatmul.mubr.f32.gmra.mrb[0].mxu0 %v569
    %v637 = vpop.f32.mrb[0].mxu0
    %v638 = vadd.f32 0.0, %v637
    %v639 = vpop.f32.mrb[0].mxu0
    %640 = vdwg.mxu0
    %641 = vst.msk [vmem:[#allocation3] sm:$0x1] %vm547, %v638
    %643 = vrot.lane.b32.xlu0 %v638, 8
    %v644 = vpop.permute.xlu0 %643
    %vm646 = vcmask 123969
    %647 = vst.msk [vmem:[#allocation3 - $0x1] sm:$0x2] %vm646, %v644
    %648 = vrot.lane.b32.xlu0 %v638, 16
    %v649 = vpop.permute.xlu0 %648
    %vm651 = vcmask 190594
    %652 = vst.msk [vmem:[#allocation3 - $0x2] sm:$0x4] %vm651, %v649
    %653 = vrot.lane.b32.xlu0 %v638, 24
    %v654 = vpop.permute.xlu0 %653
    %vm656 = vcmask 257219
    %657 = vst.msk [vmem:[#allocation3 - $0x3] sm:$0x8] %vm656, %v654
    %vm658 = vcmask 61444
    %659 = vst.msk [vmem:[#allocation3 - $0x3] sm:$0x10] %vm658, %v638
    %vm660 = vcmask 128069
    %661 = vst.msk [vmem:[#allocation3 - $0x4] sm:$0x20] %vm660, %v644
    %vm662 = vcmask 194694
    %663 = vst.msk [vmem:[#allocation3 - $0x5] sm:$0x40] %vm662, %v649
    %vm664 = vcmask 261319
    %665 = vst.msk [vmem:[#allocation3 - $0x6] sm:$0x80] %vm664, %v654
    %v667 = vsel %vm459, %v230, 0
    %v670 = vsel %vm459, %v349, 0
    %672 = vmatprep.subr.mxu0 0.0
    %673 = vmatpush1.xpose.msra.mxu0 %v670
    %674 = vmatprep.subr.mxu0 0.0
    %675 = vmatpush1.xpose.msra.mxu0 0.0
    %676 = vmatprep.subr.mxu0 0.0
    %677 = vmatpush1.xpose.msra.mxu0 0.0
    %678 = vmatprep.subr.mxu0 0.0
    %679 = vmatpush1.xpose.msra.mxu0 0.0
    %680 = vmatprep.subr.mxu0 0.0
    %681 = vmatpush1.xpose.msra.mxu0 0.0
    %682 = vmatprep.subr.mxu0 0.0
    %683 = vmatpush1.xpose.msra.mxu0 0.0
    %684 = vmatprep.subr.mxu0 0.0
    %685 = vmatpush1.xpose.msra.mxu0 0.0
    %686 = vmatprep.subr.mxu0 0.0
    %687 = vmatpush1.xpose.msra.mxu0 0.0
    %688 = vmatprep.subr.mxu0 0.0
    %689 = vmatpush1.xpose.msra.mxu0 0.0
    %690 = vmatprep.subr.mxu0 0.0
    %691 = vmatpush1.xpose.msra.mxu0 0.0
    %692 = vmatprep.subr.mxu0 0.0
    %693 = vmatpush1.xpose.msra.mxu0 0.0
    %694 = vmatprep.subr.mxu0 0.0
    %695 = vmatpush1.xpose.msra.mxu0 0.0
    %696 = vmatprep.subr.mxu0 0.0
    %697 = vmatpush1.xpose.msra.mxu0 0.0
    %698 = vmatprep.subr.mxu0 0.0
    %699 = vmatpush1.xpose.msra.mxu0 0.0
    %700 = vmatprep.subr.mxu0 0.0
    %701 = vmatpush1.xpose.msra.mxu0 0.0
    %702 = vmatprep.subr.mxu0 0.0
    %703 = vmatpush1.xpose.msra.mxu0 0.0
    %704 = vmatprep.subr.mxu0 0.0
    %705 = vmatpush1.xpose.msra.mxu0 0.0
    %706 = vmatprep.subr.mxu0 0.0
    %707 = vmatpush1.xpose.msra.mxu0 0.0
    %708 = vmatprep.subr.mxu0 0.0
    %709 = vmatpush1.xpose.msra.mxu0 0.0
    %710 = vmatprep.subr.mxu0 0.0
    %711 = vmatpush1.xpose.msra.mxu0 0.0
    %712 = vmatprep.subr.mxu0 0.0
    %713 = vmatpush1.xpose.msra.mxu0 0.0
    %714 = vmatprep.subr.mxu0 0.0
    %715 = vmatpush1.xpose.msra.mxu0 0.0
    %716 = vmatprep.subr.mxu0 0.0
    %717 = vmatpush1.xpose.msra.mxu0 0.0
    %718 = vmatprep.subr.mxu0 0.0
    %719 = vmatpush1.xpose.msra.mxu0 0.0
    %720 = vmatprep.subr.mxu0 0.0
    %721 = vmatpush1.xpose.msra.mxu0 0.0
    %722 = vmatprep.subr.mxu0 0.0
    %723 = vmatpush1.xpose.msra.mxu0 0.0
    %724 = vmatprep.subr.mxu0 0.0
    %725 = vmatpush1.xpose.msra.mxu0 0.0
    %726 = vmatprep.subr.mxu0 0.0
    %727 = vmatpush1.xpose.msra.mxu0 0.0
    %728 = vmatprep.subr.mxu0 0.0
    %729 = vmatpush1.xpose.msra.mxu0 0.0
    %730 = vmatprep.subr.mxu0 0.0
    %731 = vmatpush1.xpose.msra.mxu0 0.0
    %732 = vmatprep.subr.mxu0 0.0
    %733 = vmatpush1.xpose.msra.mxu0 0.0
    %734 = vmatprep.subr.mxu0 0.0
    %735 = vmatpush1.xpose.msra.mxu0 0.0
    %736 = vmatprep.mubr.f32.mxu0 0.0
    %737 = vmatmul.mubr.f32.gmra.mrb[0].mxu0 %v667
    %v738 = vpop.f32.mrb[0].mxu0
    %v739 = vadd.f32 0.0, %v738
    %v740 = vpop.f32.mrb[0].mxu0
    %741 = vdwg.mxu0
    %v742 = vsel %vm459, %v739, -inf
    %743 = vmax.xlane.f32.xlu0 %v742
    %v744 = vpop.xlane.xlu0 %743
    %v745 = vsub.f32 %v739, %v744
    %v746 = vmul.f32 %v745, 1.442695
    %v747 = vpow.pop %v746
    %v748 = vsel %vm459, %v747, 0.0
    %749 = vadd.xlane.f32.xlu0 %v748
    %v750 = vpop.xlane.xlu0 %749
    %v751 = vrcp.pop %v750
    %v752 = vmul.f32 %v747, %v751
    %vm753 = vcmask 59394
    %754 = vst.msk [vmem:[#allocation2 - $0x2] sm:$0x4] %vm753, %v456
    %755 = vst.msk [vmem:[#allocation2 - $0x1] sm:$0x4] %vm753, %v551
    %756 = vst.msk [vmem:[#allocation2] sm:$0x4] %vm753, %v555
    %757 = vst.msk [vmem:[#allocation2 + $0x1] sm:$0x4] %vm753, %v559
    %vm758 = vcmask 60419
    %759 = vst.msk [vmem:[#allocation2 + $0x1] sm:$0x8] %vm758, %v456
    %760 = vst.msk [vmem:[#allocation2 + $0x2] sm:$0x8] %vm758, %v551
    %761 = vst.msk [vmem:[#allocation2 + $0x3] sm:$0x8] %vm758, %v555
    %762 = vst.msk [vmem:[#allocation2 + $0x4] sm:$0x8] %vm758, %v559
    %v763 = vld [vmem:[#allocation2] sm:$0xff]
    %v765 = vsel %vm459, %v752, 0
    %767 = vmatprep.subr.mxu0 0.0
    %768 = vmatpush1.msra.mxu0 %v763
    %769 = vmatprep.subr.mxu0 0.0
    %770 = vmatpush1.msra.mxu0 0.0
    %771 = vmatprep.subr.mxu0 0.0
    %772 = vmatpush1.msra.mxu0 0.0
    %773 = vmatprep.subr.mxu0 0.0
    %774 = vmatpush1.msra.mxu0 0.0
    %775 = vmatprep.subr.mxu0 0.0
    %776 = vmatpush1.msra.mxu0 0.0
    %777 = vmatprep.subr.mxu0 0.0
    %778 = vmatpush1.msra.mxu0 0.0
    %779 = vmatprep.subr.mxu0 0.0
    %780 = vmatpush1.msra.mxu0 0.0
    %781 = vmatprep.subr.mxu0 0.0
    %782 = vmatpush1.msra.mxu0 0.0
    %783 = vmatprep.subr.mxu0 0.0
    %784 = vmatpush1.msra.mxu0 0.0
    %785 = vmatprep.subr.mxu0 0.0
    %786 = vmatpush1.msra.mxu0 0.0
    %787 = vmatprep.subr.mxu0 0.0
    %788 = vmatpush1.msra.mxu0 0.0
    %789 = vmatprep.subr.mxu0 0.0
    %790 = vmatpush1.msra.mxu0 0.0
    %791 = vmatprep.subr.mxu0 0.0
    %792 = vmatpush1.msra.mxu0 0.0
    %793 = vmatprep.subr.mxu0 0.0
    %794 = vmatpush1.msra.mxu0 0.0
    %795 = vmatprep.subr.mxu0 0.0
    %796 = vmatpush1.msra.mxu0 0.0
    %797 = vmatprep.subr.mxu0 0.0
    %798 = vmatpush1.msra.mxu0 0.0
    %799 = vmatprep.subr.mxu0 0.0
    %800 = vmatpush1.msra.mxu0 0.0
    %801 = vmatprep.subr.mxu0 0.0
    %802 = vmatpush1.msra.mxu0 0.0
    %803 = vmatprep.subr.mxu0 0.0
    %804 = vmatpush1.msra.mxu0 0.0
    %805 = vmatprep.subr.mxu0 0.0
    %806 = vmatpush1.msra.mxu0 0.0
    %807 = vmatprep.subr.mxu0 0.0
    %808 = vmatpush1.msra.mxu0 0.0
    %809 = vmatprep.subr.mxu0 0.0
    %810 = vmatpush1.msra.mxu0 0.0
    %811 = vmatprep.subr.mxu0 0.0
    %812 = vmatpush1.msra.mxu0 0.0
    %813 = vmatprep.subr.mxu0 0.0
    %814 = vmatpush1.msra.mxu0 0.0
    %815 = vmatprep.subr.mxu0 0.0
    %816 = vmatpush1.msra.mxu0 0.0
    %817 = vmatprep.subr.mxu0 0.0
    %818 = vmatpush1.msra.mxu0 0.0
    %819 = vmatprep.subr.mxu0 0.0
    %820 = vmatpush1.msra.mxu0 0.0
    %821 = vmatprep.subr.mxu0 0.0
    %822 = vmatpush1.msra.mxu0 0.0
    %823 = vmatprep.subr.mxu0 0.0
    %824 = vmatpush1.msra.mxu0 0.0
    %825 = vmatprep.subr.mxu0 0.0
    %826 = vmatpush1.msra.mxu0 0.0
    %827 = vmatprep.subr.mxu0 0.0
    %828 = vmatpush1.msra.mxu0 0.0
    %829 = vmatprep.subr.mxu0 0.0
    %830 = vmatpush1.msra.mxu0 0.0
    %831 = vmatprep.mubr.f32.mxu0 0.0
    %832 = vmatmul.mubr.f32.gmra.mrb[0].mxu0 %v765
    %v833 = vpop.f32.mrb[0].mxu0
    %v834 = vadd.f32 0.0, %v833
    %v835 = vpop.f32.mrb[0].mxu0
    %836 = vdwg.mxu0
    %837 = vst.msk [vmem:[#allocation3 + $0x2] sm:$0x1] %vm547, %v834
    %839 = vrot.lane.b32.xlu0 %v834, 8
    %v840 = vpop.permute.xlu0 %839
    %842 = vst.msk [vmem:[#allocation3 + $0x1] sm:$0x2] %vm646, %v840
    %843 = vrot.lane.b32.xlu0 %v834, 16
    %v844 = vpop.permute.xlu0 %843
    %846 = vst.msk [vmem:[#allocation3] sm:$0x4] %vm651, %v844
    %847 = vrot.lane.b32.xlu0 %v834, 24
    %v848 = vpop.permute.xlu0 %847
    %850 = vst.msk [vmem:[#allocation3 - $0x1] sm:$0x8] %vm656, %v848
    %851 = vst.msk [vmem:[#allocation3 - $0x1] sm:$0x10] %vm658, %v834
    %852 = vst.msk [vmem:[#allocation3 - $0x2] sm:$0x20] %vm660, %v840
    %853 = vst.msk [vmem:[#allocation3 - $0x3] sm:$0x40] %vm662, %v844
    %854 = vst.msk [vmem:[#allocation3 - $0x4] sm:$0x80] %vm664, %v848
    %v856 = vsel %vm459, %v231, 0
    %v859 = vsel %vm459, %v354, 0
    %861 = vmatprep.subr.mxu0 0.0
    %862 = vmatpush1.xpose.msra.mxu0 %v859
    %863 = vmatprep.subr.mxu0 0.0
    %864 = vmatpush1.xpose.msra.mxu0 0.0
    %865 = vmatprep.subr.mxu0 0.0
    %866 = vmatpush1.xpose.msra.mxu0 0.0
    %867 = vmatprep.subr.mxu0 0.0
    %868 = vmatpush1.xpose.msra.mxu0 0.0
    %869 = vmatprep.subr.mxu0 0.0
    %870 = vmatpush1.xpose.msra.mxu0 0.0
    %871 = vmatprep.subr.mxu0 0.0
    %872 = vmatpush1.xpose.msra.mxu0 0.0
    %873 = vmatprep.subr.mxu0 0.0
    %874 = vmatpush1.xpose.msra.mxu0 0.0
    %875 = vmatprep.subr.mxu0 0.0
    %876 = vmatpush1.xpose.msra.mxu0 0.0
    %877 = vmatprep.subr.mxu0 0.0
    %878 = vmatpush1.xpose.msra.mxu0 0.0
    %879 = vmatprep.subr.mxu0 0.0
    %880 = vmatpush1.xpose.msra.mxu0 0.0
    %881 = vmatprep.subr.mxu0 0.0
    %882 = vmatpush1.xpose.msra.mxu0 0.0
    %883 = vmatprep.subr.mxu0 0.0
    %884 = vmatpush1.xpose.msra.mxu0 0.0
    %885 = vmatprep.subr.mxu0 0.0
    %886 = vmatpush1.xpose.msra.mxu0 0.0
    %887 = vmatprep.subr.mxu0 0.0
    %888 = vmatpush1.xpose.msra.mxu0 0.0
    %889 = vmatprep.subr.mxu0 0.0
    %890 = vmatpush1.xpose.msra.mxu0 0.0
    %891 = vmatprep.subr.mxu0 0.0
    %892 = vmatpush1.xpose.msra.mxu0 0.0
    %893 = vmatprep.subr.mxu0 0.0
    %894 = vmatpush1.xpose.msra.mxu0 0.0
    %895 = vmatprep.subr.mxu0 0.0
    %896 = vmatpush1.xpose.msra.mxu0 0.0
    %897 = vmatprep.subr.mxu0 0.0
    %898 = vmatpush1.xpose.msra.mxu0 0.0
    %899 = vmatprep.subr.mxu0 0.0
    %900 = vmatpush1.xpose.msra.mxu0 0.0
    %901 = vmatprep.subr.mxu0 0.0
    %902 = vmatpush1.xpose.msra.mxu0 0.0
    %903 = vmatprep.subr.mxu0 0.0
    %904 = vmatpush1.xpose.msra.mxu0 0.0
    %905 = vmatprep.subr.mxu0 0.0
    %906 = vmatpush1.xpose.msra.mxu0 0.0
    %907 = vmatprep.subr.mxu0 0.0
    %908 = vmatpush1.xpose.msra.mxu0 0.0
    %909 = vmatprep.subr.mxu0 0.0
    %910 = vmatpush1.xpose.msra.mxu0 0.0
    %911 = vmatprep.subr.mxu0 0.0
    %912 = vmatpush1.xpose.msra.mxu0 0.0
    %913 = vmatprep.subr.mxu0 0.0
    %914 = vmatpush1.xpose.msra.mxu0 0.0
    %915 = vmatprep.subr.mxu0 0.0
    %916 = vmatpush1.xpose.msra.mxu0 0.0
    %917 = vmatprep.subr.mxu0 0.0
    %918 = vmatpush1.xpose.msra.mxu0 0.0
    %919 = vmatprep.subr.mxu0 0.0
    %920 = vmatpush1.xpose.msra.mxu0 0.0
    %921 = vmatprep.subr.mxu0 0.0
    %922 = vmatpush1.xpose.msra.mxu0 0.0
    %923 = vmatprep.subr.mxu0 0.0
    %924 = vmatpush1.xpose.msra.mxu0 0.0
    %925 = vmatprep.mubr.f32.mxu0 0.0
    %926 = vmatmul.mubr.f32.gmra.mrb[0].mxu0 %v856
    %v927 = vpop.f32.mrb[0].mxu0
    %v928 = vadd.f32 0.0, %v927
    %v929 = vpop.f32.mrb[0].mxu0
    %930 = vdwg.mxu0
    %v931 = vsel %vm459, %v928, -inf
    %932 = vmax.xlane.f32.xlu0 %v931
    %v933 = vpop.xlane.xlu0 %932
    %v934 = vsub.f32 %v928, %v933
    %v935 = vmul.f32 %v934, 1.442695
    %v936 = vpow.pop %v935
    %v937 = vsel %vm459, %v936, 0.0
    %938 = vadd.xlane.f32.xlu0 %v937
    %v939 = vpop.xlane.xlu0 %938
    %v940 = vrcp.pop %v939
    %v941 = vmul.f32 %v936, %v940
    %942 = vst.msk [vmem:[#allocation2 - $0x4] sm:$0x10] %vm658, %v456
    %943 = vst.msk [vmem:[#allocation2 - $0x3] sm:$0x10] %vm658, %v551
    %944 = vst.msk [vmem:[#allocation2 - $0x2] sm:$0x10] %vm658, %v555
    %945 = vst.msk [vmem:[#allocation2 - $0x1] sm:$0x10] %vm658, %v559
    %vm946 = vcmask 62469
    %947 = vst.msk [vmem:[#allocation2 - $0x1] sm:$0x20] %vm946, %v456
    %948 = vst.msk [vmem:[#allocation2] sm:$0x20] %vm946, %v551
    %949 = vst.msk [vmem:[#allocation2 + $0x1] sm:$0x20] %vm946, %v555
    %950 = vst.msk [vmem:[#allocation2 + $0x2] sm:$0x20] %vm946, %v559
    %v951 = vld [vmem:[#allocation2] sm:$0xff]
    %v953 = vsel %vm459, %v941, 0
    %955 = vmatprep.subr.mxu0 0.0
    %956 = vmatpush1.msra.mxu0 %v951
    %957 = vmatprep.subr.mxu0 0.0
    %958 = vmatpush1.msra.mxu0 0.0
    %959 = vmatprep.subr.mxu0 0.0
    %960 = vmatpush1.msra.mxu0 0.0
    %961 = vmatprep.subr.mxu0 0.0
    %962 = vmatpush1.msra.mxu0 0.0
    %963 = vmatprep.subr.mxu0 0.0
    %964 = vmatpush1.msra.mxu0 0.0
    %965 = vmatprep.subr.mxu0 0.0
    %966 = vmatpush1.msra.mxu0 0.0
    %967 = vmatprep.subr.mxu0 0.0
    %968 = vmatpush1.msra.mxu0 0.0
    %969 = vmatprep.subr.mxu0 0.0
    %970 = vmatpush1.msra.mxu0 0.0
    %971 = vmatprep.subr.mxu0 0.0
    %972 = vmatpush1.msra.mxu0 0.0
    %973 = vmatprep.subr.mxu0 0.0
    %974 = vmatpush1.msra.mxu0 0.0
    %975 = vmatprep.subr.mxu0 0.0
    %976 = vmatpush1.msra.mxu0 0.0
    %977 = vmatprep.subr.mxu0 0.0
    %978 = vmatpush1.msra.mxu0 0.0
    %979 = vmatprep.subr.mxu0 0.0
    %980 = vmatpush1.msra.mxu0 0.0
    %981 = vmatprep.subr.mxu0 0.0
    %982 = vmatpush1.msra.mxu0 0.0
    %983 = vmatprep.subr.mxu0 0.0
    %984 = vmatpush1.msra.mxu0 0.0
    %985 = vmatprep.subr.mxu0 0.0
    %986 = vmatpush1.msra.mxu0 0.0
    %987 = vmatprep.subr.mxu0 0.0
    %988 = vmatpush1.msra.mxu0 0.0
    %989 = vmatprep.subr.mxu0 0.0
    %990 = vmatpush1.msra.mxu0 0.0
    %991 = vmatprep.subr.mxu0 0.0
    %992 = vmatpush1.msra.mxu0 0.0
    %993 = vmatprep.subr.mxu0 0.0
    %994 = vmatpush1.msra.mxu0 0.0
    %995 = vmatprep.subr.mxu0 0.0
    %996 = vmatpush1.msra.mxu0 0.0
    %997 = vmatprep.subr.mxu0 0.0
    %998 = vmatpush1.msra.mxu0 0.0
    %999 = vmatprep.subr.mxu0 0.0
    %1000 = vmatpush1.msra.mxu0 0.0
    %1001 = vmatprep.subr.mxu0 0.0
    %1002 = vmatpush1.msra.mxu0 0.0
    %1003 = vmatprep.subr.mxu0 0.0
    %1004 = vmatpush1.msra.mxu0 0.0
    %1005 = vmatprep.subr.mxu0 0.0
    %1006 = vmatpush1.msra.mxu0 0.0
    %1007 = vmatprep.subr.mxu0 0.0
    %1008 = vmatpush1.msra.mxu0 0.0
    %1009 = vmatprep.subr.mxu0 0.0
    %1010 = vmatpush1.msra.mxu0 0.0
    %1011 = vmatprep.subr.mxu0 0.0
    %1012 = vmatpush1.msra.mxu0 0.0
    %1013 = vmatprep.subr.mxu0 0.0
    %1014 = vmatpush1.msra.mxu0 0.0
    %1015 = vmatprep.subr.mxu0 0.0
    %1016 = vmatpush1.msra.mxu0 0.0
    %1017 = vmatprep.subr.mxu0 0.0
    %1018 = vmatpush1.msra.mxu0 0.0
    %1019 = vmatprep.mubr.f32.mxu0 0.0
    %1020 = vmatmul.mubr.f32.gmra.mrb[0].mxu0 %v953
    %v1021 = vpop.f32.mrb[0].mxu0
    %v1022 = vadd.f32 0.0, %v1021
    %v1023 = vpop.f32.mrb[0].mxu0
    %1024 = vdwg.mxu0
    %1025 = vst.msk [vmem:[#allocation3 + $0x4] sm:$0x1] %vm547, %v1022
    %1027 = vrot.lane.b32.xlu0 %v1022, 8
    %v1028 = vpop.permute.xlu0 %1027
    %1030 = vst.msk [vmem:[#allocation3 + $0x3] sm:$0x2] %vm646, %v1028
    %1031 = vrot.lane.b32.xlu0 %v1022, 16
    %v1032 = vpop.permute.xlu0 %1031
    %1034 = vst.msk [vmem:[#allocation3 + $0x2] sm:$0x4] %vm651, %v1032
    %1035 = vrot.lane.b32.xlu0 %v1022, 24
    %v1036 = vpop.permute.xlu0 %1035
    %1038 = vst.msk [vmem:[#allocation3 + $0x1] sm:$0x8] %vm656, %v1036
    %1039 = vst.msk [vmem:[#allocation3 + $0x1] sm:$0x10] %vm658, %v1022
    %1040 = vst.msk [vmem:[#allocation3] sm:$0x20] %vm660, %v1028
    %1041 = vst.msk [vmem:[#allocation3 - $0x1] sm:$0x40] %vm662, %v1032
    %1042 = vst.msk [vmem:[#allocation3 - $0x2] sm:$0x80] %vm664, %v1036
    %v1044 = vsel %vm459, %v232, 0
    %v1047 = vsel %vm459, %v359, 0
    %1049 = vmatprep.subr.mxu0 0.0
    %1050 = vmatpush1.xpose.msra.mxu0 %v1047
    %1051 = vmatprep.subr.mxu0 0.0
    %1052 = vmatpush1.xpose.msra.mxu0 0.0
    %1053 = vmatprep.subr.mxu0 0.0
    %1054 = vmatpush1.xpose.msra.mxu0 0.0
    %1055 = vmatprep.subr.mxu0 0.0
    %1056 = vmatpush1.xpose.msra.mxu0 0.0
    %1057 = vmatprep.subr.mxu0 0.0
    %1058 = vmatpush1.xpose.msra.mxu0 0.0
    %1059 = vmatprep.subr.mxu0 0.0
    %1060 = vmatpush1.xpose.msra.mxu0 0.0
    %1061 = vmatprep.subr.mxu0 0.0
    %1062 = vmatpush1.xpose.msra.mxu0 0.0
    %1063 = vmatprep.subr.mxu0 0.0
    %1064 = vmatpush1.xpose.msra.mxu0 0.0
    %1065 = vmatprep.subr.mxu0 0.0
    %1066 = vmatpush1.xpose.msra.mxu0 0.0
    %1067 = vmatprep.subr.mxu0 0.0
    %1068 = vmatpush1.xpose.msra.mxu0 0.0
    %1069 = vmatprep.subr.mxu0 0.0
    %1070 = vmatpush1.xpose.msra.mxu0 0.0
    %1071 = vmatprep.subr.mxu0 0.0
    %1072 = vmatpush1.xpose.msra.mxu0 0.0
    %1073 = vmatprep.subr.mxu0 0.0
    %1074 = vmatpush1.xpose.msra.mxu0 0.0
    %1075 = vmatprep.subr.mxu0 0.0
    %1076 = vmatpush1.xpose.msra.mxu0 0.0
    %1077 = vmatprep.subr.mxu0 0.0
    %1078 = vmatpush1.xpose.msra.mxu0 0.0
    %1079 = vmatprep.subr.mxu0 0.0
    %1080 = vmatpush1.xpose.msra.mxu0 0.0
    %1081 = vmatprep.subr.mxu0 0.0
    %1082 = vmatpush1.xpose.msra.mxu0 0.0
    %1083 = vmatprep.subr.mxu0 0.0
    %1084 = vmatpush1.xpose.msra.mxu0 0.0
    %1085 = vmatprep.subr.mxu0 0.0
    %1086 = vmatpush1.xpose.msra.mxu0 0.0
    %1087 = vmatprep.subr.mxu0 0.0
    %1088 = vmatpush1.xpose.msra.mxu0 0.0
    %1089 = vmatprep.subr.mxu0 0.0
    %1090 = vmatpush1.xpose.msra.mxu0 0.0
    %1091 = vmatprep.subr.mxu0 0.0
    %1092 = vmatpush1.xpose.msra.mxu0 0.0
    %1093 = vmatprep.subr.mxu0 0.0
    %1094 = vmatpush1.xpose.msra.mxu0 0.0
    %1095 = vmatprep.subr.mxu0 0.0
    %1096 = vmatpush1.xpose.msra.mxu0 0.0
    %1097 = vmatprep.subr.mxu0 0.0
    %1098 = vmatpush1.xpose.msra.mxu0 0.0
    %1099 = vmatprep.subr.mxu0 0.0
    %1100 = vmatpush1.xpose.msra.mxu0 0.0
    %1101 = vmatprep.subr.mxu0 0.0
    %1102 = vmatpush1.xpose.msra.mxu0 0.0
    %1103 = vmatprep.subr.mxu0 0.0
    %1104 = vmatpush1.xpose.msra.mxu0 0.0
    %1105 = vmatprep.subr.mxu0 0.0
    %1106 = vmatpush1.xpose.msra.mxu0 0.0
    %1107 = vmatprep.subr.mxu0 0.0
    %1108 = vmatpush1.xpose.msra.mxu0 0.0
    %1109 = vmatprep.subr.mxu0 0.0
    %1110 = vmatpush1.xpose.msra.mxu0 0.0
    %1111 = vmatprep.subr.mxu0 0.0
    %1112 = vmatpush1.xpose.msra.mxu0 0.0
    %1113 = vmatprep.mubr.f32.mxu0 0.0
    %1114 = vmatmul.mubr.f32.gmra.mrb[0].mxu0 %v1044
    %v1115 = vpop.f32.mrb[0].mxu0
    %v1116 = vadd.f32 0.0, %v1115
    %v1117 = vpop.f32.mrb[0].mxu0
    %1118 = vdwg.mxu0
    %v1119 = vsel %vm459, %v1116, -inf
    %1120 = vmax.xlane.f32.xlu0 %v1119
    %v1121 = vpop.xlane.xlu0 %1120
    %v1122 = vsub.f32 %v1116, %v1121
    %v1123 = vmul.f32 %v1122, 1.442695
    %v1124 = vpow.pop %v1123
    %v1125 = vsel %vm459, %v1124, 0.0
    %1126 = vadd.xlane.f32.xlu0 %v1125
    %v1127 = vpop.xlane.xlu0 %1126
    %v1128 = vrcp.pop %v1127
    %v1129 = vmul.f32 %v1124, %v1128
    %vm1130 = vcmask 63494
    %1131 = vst.msk [vmem:[#allocation2 - $0x6] sm:$0x40] %vm1130, %v456
    %1132 = vst.msk [vmem:[#allocation2 - $0x5] sm:$0x40] %vm1130, %v551
    %1133 = vst.msk [vmem:[#allocation2 - $0x4] sm:$0x40] %vm1130, %v555
    %1134 = vst.msk [vmem:[#allocation2 - $0x3] sm:$0x40] %vm1130, %v559
    %vm1135 = vcmask 64519
    %1136 = vst.msk [vmem:[#allocation2 - $0x3] sm:$0x80] %vm1135, %v456
    %1137 = vst.msk [vmem:[#allocation2 - $0x2] sm:$0x80] %vm1135, %v551
    %1138 = vst.msk [vmem:[#allocation2 - $0x1] sm:$0x80] %vm1135, %v555
    %1139 = vst.msk [vmem:[#allocation2] sm:$0x80] %vm1135, %v559
    %v1140 = vld [vmem:[#allocation2] sm:$0xff]
    %v1142 = vsel %vm459, %v1129, 0
    %1144 = vmatprep.subr.mxu0 0.0
    %1145 = vmatpush1.msra.mxu0 %v1140
    %1146 = vmatprep.subr.mxu0 0.0
    %1147 = vmatpush1.msra.mxu0 0.0
    %1148 = vmatprep.subr.mxu0 0.0
    %1149 = vmatpush1.msra.mxu0 0.0
    %1150 = vmatprep.subr.mxu0 0.0
    %1151 = vmatpush1.msra.mxu0 0.0
    %1152 = vmatprep.subr.mxu0 0.0
    %1153 = vmatpush1.msra.mxu0 0.0
    %1154 = vmatprep.subr.mxu0 0.0
    %1155 = vmatpush1.msra.mxu0 0.0
    %1156 = vmatprep.subr.mxu0 0.0
    %1157 = vmatpush1.msra.mxu0 0.0
    %1158 = vmatprep.subr.mxu0 0.0
    %1159 = vmatpush1.msra.mxu0 0.0
    %1160 = vmatprep.subr.mxu0 0.0
    %1161 = vmatpush1.msra.mxu0 0.0
    %1162 = vmatprep.subr.mxu0 0.0
    %1163 = vmatpush1.msra.mxu0 0.0
    %1164 = vmatprep.subr.mxu0 0.0
    %1165 = vmatpush1.msra.mxu0 0.0
    %1166 = vmatprep.subr.mxu0 0.0
    %1167 = vmatpush1.msra.mxu0 0.0
    %1168 = vmatprep.subr.mxu0 0.0
    %1169 = vmatpush1.msra.mxu0 0.0
    %1170 = vmatprep.subr.mxu0 0.0
    %1171 = vmatpush1.msra.mxu0 0.0
    %1172 = vmatprep.subr.mxu0 0.0
    %1173 = vmatpush1.msra.mxu0 0.0
    %1174 = vmatprep.subr.mxu0 0.0
    %1175 = vmatpush1.msra.mxu0 0.0
    %1176 = vmatprep.subr.mxu0 0.0
    %1177 = vmatpush1.msra.mxu0 0.0
    %1178 = vmatprep.subr.mxu0 0.0
    %1179 = vmatpush1.msra.mxu0 0.0
    %1180 = vmatprep.subr.mxu0 0.0
    %1181 = vmatpush1.msra.mxu0 0.0
    %1182 = vmatprep.subr.mxu0 0.0
    %1183 = vmatpush1.msra.mxu0 0.0
    %1184 = vmatprep.subr.mxu0 0.0
    %1185 = vmatpush1.msra.mxu0 0.0
    %1186 = vmatprep.subr.mxu0 0.0
    %1187 = vmatpush1.msra.mxu0 0.0
    %1188 = vmatprep.subr.mxu0 0.0
    %1189 = vmatpush1.msra.mxu0 0.0
    %1190 = vmatprep.subr.mxu0 0.0
    %1191 = vmatpush1.msra.mxu0 0.0
    %1192 = vmatprep.subr.mxu0 0.0
    %1193 = vmatpush1.msra.mxu0 0.0
    %1194 = vmatprep.subr.mxu0 0.0
    %1195 = vmatpush1.msra.mxu0 0.0
    %1196 = vmatprep.subr.mxu0 0.0
    %1197 = vmatpush1.msra.mxu0 0.0
    %1198 = vmatprep.subr.mxu0 0.0
    %1199 = vmatpush1.msra.mxu0 0.0
    %1200 = vmatprep.subr.mxu0 0.0
    %1201 = vmatpush1.msra.mxu0 0.0
    %1202 = vmatprep.subr.mxu0 0.0
    %1203 = vmatpush1.msra.mxu0 0.0
    %1204 = vmatprep.subr.mxu0 0.0
    %1205 = vmatpush1.msra.mxu0 0.0
    %1206 = vmatprep.subr.mxu0 0.0
    %1207 = vmatpush1.msra.mxu0 0.0
    %1208 = vmatprep.mubr.f32.mxu0 0.0
    %1209 = vmatmul.mubr.f32.gmra.mrb[0].mxu0 %v1142
    %v1210 = vpop.f32.mrb[0].mxu0
    %v1211 = vadd.f32 0.0, %v1210
    %v1212 = vpop.f32.mrb[0].mxu0
    %1213 = vdwg.mxu0
    %1214 = vst.msk [vmem:[#allocation3 + $0x6] sm:$0x1] %vm547, %v1211
    %1216 = vrot.lane.b32.xlu0 %v1211, 8
    %v1217 = vpop.permute.xlu0 %1216
    %1219 = vst.msk [vmem:[#allocation3 + $0x5] sm:$0x2] %vm646, %v1217
    %1220 = vrot.lane.b32.xlu0 %v1211, 16
    %v1221 = vpop.permute.xlu0 %1220
    %1223 = vst.msk [vmem:[#allocation3 + $0x4] sm:$0x4] %vm651, %v1221
    %1224 = vrot.lane.b32.xlu0 %v1211, 24
    %v1225 = vpop.permute.xlu0 %1224
    %1227 = vst.msk [vmem:[#allocation3 + $0x3] sm:$0x8] %vm656, %v1225
    %1228 = vst.msk [vmem:[#allocation3 + $0x3] sm:$0x10] %vm658, %v1211
    %1229 = vst.msk [vmem:[#allocation3 + $0x2] sm:$0x20] %vm660, %v1217
    %1230 = vst.msk [vmem:[#allocation3 + $0x1] sm:$0x40] %vm662, %v1221
    %1231 = vst.msk [vmem:[#allocation3] sm:$0x80] %vm664, %v1225
    %v1232 = vld [vmem:[#allocation3] sm:$0xff]
    %v1233 = vld [vmem:[#allocation10] sm:$0xff]
    %v1234 = vld [vmem:[#allocation10 + $0x8] sm:$0xff]
    %v1235 = vld [vmem:[#allocation10 + $0x10] sm:$0xff]
    %v1236 = vld [vmem:[#allocation10 + $0x18] sm:$0xff]
    %v1237 = vld [vmem:[#allocation12] sm:$0x1]
    %v1239 = vlaneseq
    %v1240 = vshrl.u32 %v1239, 7
    %v1241 = vsub.s32 0, %v1240
    %v1242 = vrot.slane %v1237, %v1241
    %v1245 = vsel %vm128, %v1232, 0
    %v1248 = vsel %vm128, %v1233, 0
    %v1251 = vsel %vm128, %v1234, 0
    %v1254 = vsel %vm128, %v1235, 0
    %v1257 = vsel %vm128, %v1236, 0
    %1259 = vmatprep.subr.mxu0 0.0
    %1260 = vmatpush1.xpose.msra.mxu0 %v1248
    %1261 = vmatprep.subr.mxu0 0.0
    %1262 = vmatpush1.xpose.msra.mxu0 %v1251
    %1263 = vmatprep.subr.mxu0 0.0
    %1264 = vmatpush1.xpose.msra.mxu0 %v1254
    %1265 = vmatprep.subr.mxu0 0.0
    %1266 = vmatpush1.xpose.msra.mxu0 %v1257
    %1267 = vmatprep.subr.mxu0 0.0
    %1268 = vmatpush1.xpose.msra.mxu0 0.0
    %1269 = vmatprep.subr.mxu0 0.0
    %1270 = vmatpush1.xpose.msra.mxu0 0.0
    %1271 = vmatprep.subr.mxu0 0.0
    %1272 = vmatpush1.xpose.msra.mxu0 0.0
    %1273 = vmatprep.subr.mxu0 0.0
    %1274 = vmatpush1.xpose.msra.mxu0 0.0
    %1275 = vmatprep.subr.mxu0 0.0
    %1276 = vmatpush1.xpose.msra.mxu0 0.0
    %1277 = vmatprep.subr.mxu0 0.0
    %1278 = vmatpush1.xpose.msra.mxu0 0.0
    %1279 = vmatprep.subr.mxu0 0.0
    %1280 = vmatpush1.xpose.msra.mxu0 0.0
    %1281 = vmatprep.subr.mxu0 0.0
    %1282 = vmatpush1.xpose.msra.mxu0 0.0
    %1283 = vmatprep.subr.mxu0 0.0
    %1284 = vmatpush1.xpose.msra.mxu0 0.0
    %1285 = vmatprep.subr.mxu0 0.0
    %1286 = vmatpush1.xpose.msra.mxu0 0.0
    %1287 = vmatprep.subr.mxu0 0.0
    %1288 = vmatpush1.xpose.msra.mxu0 0.0
    %1289 = vmatprep.subr.mxu0 0.0
    %1290 = vmatpush1.xpose.msra.mxu0 0.0
    %1291 = vmatprep.subr.mxu0 0.0
    %1292 = vmatpush1.xpose.msra.mxu0 0.0
    %1293 = vmatprep.subr.mxu0 0.0
    %1294 = vmatpush1.xpose.msra.mxu0 0.0
    %1295 = vmatprep.subr.mxu0 0.0
    %1296 = vmatpush1.xpose.msra.mxu0 0.0
    %1297 = vmatprep.subr.mxu0 0.0
    %1298 = vmatpush1.xpose.msra.mxu0 0.0
    %1299 = vmatprep.subr.mxu0 0.0
    %1300 = vmatpush1.xpose.msra.mxu0 0.0
    %1301 = vmatprep.subr.mxu0 0.0
    %1302 = vmatpush1.xpose.msra.mxu0 0.0
    %1303 = vmatprep.subr.mxu0 0.0
    %1304 = vmatpush1.xpose.msra.mxu0 0.0
    %1305 = vmatprep.subr.mxu0 0.0
    %1306 = vmatpush1.xpose.msra.mxu0 0.0
    %1307 = vmatprep.subr.mxu0 0.0
    %1308 = vmatpush1.xpose.msra.mxu0 0.0
    %1309 = vmatprep.subr.mxu0 0.0
    %1310 = vmatpush1.xpose.msra.mxu0 0.0
    %1311 = vmatprep.subr.mxu0 0.0
    %1312 = vmatpush1.xpose.msra.mxu0 0.0
    %1313 = vmatprep.subr.mxu0 0.0
    %1314 = vmatpush1.xpose.msra.mxu0 0.0
    %1315 = vmatprep.subr.mxu0 0.0
    %1316 = vmatpush1.xpose.msra.mxu0 0.0
    %1317 = vmatprep.subr.mxu0 0.0
    %1318 = vmatpush1.xpose.msra.mxu0 0.0
    %1319 = vmatprep.subr.mxu0 0.0
    %1320 = vmatpush1.xpose.msra.mxu0 0.0
    %1321 = vmatprep.subr.mxu0 0.0
    %1322 = vmatpush1.xpose.msra.mxu0 0.0
    %1323 = vmatprep.mubr.f32.mxu0 0.0
    %1324 = vmatmul.mubr.f32.gmra.mrb[0].mxu0 %v1245
    %v1325 = vpop.f32.mrb[0].mxu0
    %v1326 = vadd.f32 %v1242, %v1325
    %v1327 = vpop.f32.mrb[0].mxu0
    %1328 = vdwg.mxu0
    %1329 = vst.msk [vmem:[#allocation13] sm:$0xff] %vm128, %v1326
    // Predicated region
    $region66: #{multi_head_attention.1} parent=1 // pred_check
      _
    $region67: #{multi_head_attention.1} parent=1 // pred_check_branch
      %1331 = sbr.rel (0) target = $region69
    $region68: #{multi_head_attention.1} parent=1 // pred_region
      %s1333 = ssub.s32 128, 128
      %1334 = vsyncadd [#allocation6], %s1333
      %s1336 = sshll.u32 [#allocation13], 4
      %s1337 = int_to_ptr.vmem [resolvable:$true] %s1336
      %1339 = dma.vmem_to_hbm [thread:$0]  %s1337, 128, %s11, [#allocation6]
    $region69: #{multi_head_attention.1} parent=1 // pred_fallthru
      _
    // Predicated region
    $region70: #{multi_head_attention.1} parent=1 // pred_check
      _
    $region71: #{multi_head_attention.1} parent=1 // pred_check_branch
      %1341 = sbr.rel (0) target = $region73
    $region72: #{multi_head_attention.1} parent=1 // pred_region
      %1342 = dma.done [#allocation6], 128
    $region73: #{multi_head_attention.1} parent=1 // pred_fallthru
      _
    %1343 = vsyncpa [#allocation5], 1
    %1344 = vsyncpa [#allocation8], 1
    %1345 = vsyncpa [#allocation11], 1
    %1346 = vsyncpa [#allocation6], 1

</llo_original>
